<compile_context>
chip_gen: v7x
topology: tpu7x:2x2x1
jax: 0.10.0
libtpu: 0.0.40
codegen_flags: <defaults>
</compile_context>

<pallas_src>
import functools

import numpy as np
import jax
import jax.numpy as jnp
from jax import lax
from jax.experimental import pallas as pl
from jax.experimental.pallas import tpu as pltpu


def normalized_lstm_kernel(x_ref, we_ref, be_ref, lng_ref, lnb_ref,
                           wih_f_ref, whh_f_ref, bias_f_ref,
                           wih_b_ref, bias_b_ref,
                           out_ref,
                           gx_ref, h_ref, c_ref,
                           *, TC, BB, H, unroll):
    c_idx = pl.program_id(1)
    nc = pl.num_programs(1)

    # ---- Embedding (Linear + LayerNorm + Tanh), fused per chunk; no emb
    #      scratch round-trip.  MXU operands bf16, math f32. ----
    z = jnp.dot(x_ref[...], we_ref[...],
                preferred_element_type=jnp.float32) + be_ref[...]
    mu = jnp.mean(z, axis=-1, keepdims=True)
    var = jnp.mean((z - mu) ** 2, axis=-1, keepdims=True)
    emb = jnp.tanh((z - mu) * lax.rsqrt(var + 1e-5) * lng_ref[...] + lnb_ref[...])

    # ---- Input->gate projection for ALL timesteps of the chunk in one MXU
    #      matmul (hoisted out of the recurrence). ----
    gx_ref[...] = (jnp.dot(emb.astype(jnp.bfloat16), wih_f_ref[...],
                           preferred_element_type=jnp.float32)
                   + bias_f_ref[...])

    # ---- Reset carried state at the first chunk of each batch block. ----
    @pl.when(c_idx == 0)
    def _():
        h_ref[...] = jnp.zeros_like(h_ref)
        c_ref[...] = jnp.zeros_like(c_ref)

    # Recurrence weight loaded once per chunk (bf16).
    whh_f = whh_f_ref[...]

    def gate_math(gates, c_prev):
        # Gate columns are pre-packed offline as (i, f, o, g):
        # sigmoid over the first 3H columns, tanh only over the last H.
        sig = jax.nn.sigmoid(gates[:, :3 * H])
        i = sig[:, 0 * H:1 * H]
        f = sig[:, 1 * H:2 * H]
        o = sig[:, 2 * H:3 * H]
        g = jnp.tanh(gates[:, 3 * H:4 * H])
        c_new = f * c_prev + i * g
        h_new = o * jnp.tanh(c_new)
        return h_new, c_new

    # ---- Forward-direction recurrence over the chunk; h/c live in vregs. ----
    def step(t, carry):
        h, c_state = carry
        row = pl.multiple_of(t * BB, BB)
        gates = gx_ref[pl.ds(row, BB), :] + jnp.dot(
            h.astype(jnp.bfloat16), whh_f, preferred_element_type=jnp.float32)
        return gate_math(gates, c_state)

    h_last, c_last = lax.fori_loop(0, TC, step, (h_ref[...], c_ref[...]),
                                   unroll=unroll)
    h_ref[...] = h_last
    c_ref[...] = c_last

    # ---- Last chunk: one reverse-direction step (zero state, input = last
    #      timestep's embedding), combine the two directions, write output. ----
    @pl.when(c_idx == nc - 1)
    def _():
        emb_last = emb[(TC - 1) * BB:, :]
        gates_b = (jnp.dot(emb_last.astype(jnp.bfloat16), wih_b_ref[...],
                           preferred_element_type=jnp.float32)
                   + bias_b_ref[...])
        h_bwd, _ = gate_math(gates_b, jnp.zeros((BB, H), jnp.float32))
        out_ref[...] = 0.5 * (h_last + h_bwd)


def _pack_gate_weight(w):
    """Torch (4H, H) rows (i,f,g,o) -> (H, 4H) columns packed as (i,f,o,g)."""
    i, f, g, o = jnp.split(w, 4, axis=0)
    return jnp.concatenate([i, f, o, g], axis=0).T


def _pack_gate_bias(b_ih, b_hh):
    b = b_ih + b_hh
    i, f, g, o = jnp.split(b, 4)
    return jnp.concatenate([i, f, o, g]).reshape(1, -1)


def normalized_lstm_forward(x, params, *, time_chunk=None, batch_block=None):
    B, T, D = x.shape
    H = params["w_emb"].shape[0]            # torch Linear weight is (H, D)
    TC = time_chunk if time_chunk is not None else T
    BB = batch_block if batch_block is not None else B
    assert T % TC == 0 and B % BB == 0 and BB % 8 == 0
    nb, nc = B // BB, T // TC

    # --- offline packing: "x @ W" orientation, gate reorder, bf16 MXU operands
    we = params["w_emb"].T.astype(jnp.bfloat16)                      # (D, H)
    be = params["b_emb"].reshape(1, H).astype(jnp.float32)
    lng = params["ln_g"].reshape(1, H).astype(jnp.float32)
    lnb = params["ln_b"].reshape(1, H).astype(jnp.float32)
    wih_f = _pack_gate_weight(params["wih_f"]).astype(jnp.bfloat16)  # (H, 4H)
    whh_f = _pack_gate_weight(params["whh_f"]).astype(jnp.bfloat16)
    bias_f = _pack_gate_bias(params["bih_f"], params["bhh_f"])
    wih_b = _pack_gate_weight(params["wih_b"]).astype(jnp.bfloat16)
    bias_b = _pack_gate_bias(params["bih_b"], params["bhh_b"])

    # Rearrange x so each (batch-block, time-chunk) is one contiguous,
    # time-major slab: x_arr[b, t*BB + j] = x[b*BB + j, t].
    x_arr = (x.reshape(nb, BB, T, D).transpose(0, 2, 1, 3)
              .reshape(nb, T * BB, D).astype(jnp.bfloat16))

    kernel = functools.partial(normalized_lstm_kernel, TC=TC, BB=BB, H=H,
                               unroll=True if TC <= 8 else 8)

    const2d = lambda shape: pl.BlockSpec(shape, lambda b, c: (0, 0))

    grid_spec = pltpu.PrefetchScalarGridSpec(
        num_scalar_prefetch=0,
        grid=(nb, nc),
        in_specs=[
            pl.BlockSpec((None, TC * BB, D), lambda b, c: (b, c, 0)),  # x chunk
            const2d((D, H)),           # W_emb
            const2d((1, H)),           # b_emb
            const2d((1, H)),           # ln gamma
            const2d((1, H)),           # ln beta
            const2d((H, 4 * H)),       # W_ih fwd (packed)
            const2d((H, 4 * H)),       # W_hh fwd (packed)
            const2d((1, 4 * H)),       # bias fwd (packed)
            const2d((H, 4 * H)),       # W_ih bwd (packed)
            const2d((1, 4 * H)),       # bias bwd (packed)
        ],
        out_specs=pl.BlockSpec((BB, H), lambda b, c: (b, 0)),
        scratch_shapes=[
            pltpu.VMEM((TC * BB, 4 * H), jnp.float32),   # per-chunk gx
            pltpu.VMEM((BB, H), jnp.float32),            # carried h
            pltpu.VMEM((BB, H), jnp.float32),            # carried c
        ],
    )

    return pl.pallas_call(
        kernel,
        out_shape=jax.ShapeDtypeStruct((B, H), jnp.float32),
        grid_spec=grid_spec,
        compiler_params=pltpu.CompilerParams(
            dimension_semantics=("parallel", "arbitrary"),
            vmem_limit_bytes=32 * 1024 * 1024),
    )(x_arr, we, be, lng, lnb, wih_f, whh_f, bias_f, wih_b, bias_b)


def init_params(key, D, H):
    """Deterministic synthetic parameters mirroring the module's __init__
    (raw PyTorch layout; the wrapper does the kernel-side packing)."""
    k = jax.random.split(key, 7)
    gain = 5.0 / 3.0                                   # calculate_gain('tanh')
    bound = gain * np.sqrt(6.0 / (D + H))
    w_emb = jax.random.uniform(k[0], (H, D), jnp.float32, -bound, bound)
    stdv = 1.0 / np.sqrt(H)
    u = lambda kk, s: jax.random.uniform(kk, s, jnp.float32, -stdv, stdv)
    return dict(
        w_emb=w_emb,
        b_emb=jnp.zeros((H,), jnp.float32),
        ln_g=jnp.ones((H,), jnp.float32),
        ln_b=jnp.zeros((H,), jnp.float32),
        wih_f=u(k[1], (4 * H, H)), whh_f=u(k[2], (4 * H, H)),
        bih_f=u(k[3], (4 * H,)),
        bhh_f=jnp.full((4 * H,), -0.1, jnp.float32),   # bias_hh_l0.fill_(-0.1)
        wih_b=u(k[4], (4 * H, H)), whh_b=u(k[5], (4 * H, H)),
        bih_b=u(k[6], (4 * H,)),
        bhh_b=jnp.full((4 * H,), -0.1, jnp.float32),   # bias_hh_l0_reverse
    )


def reference_forward(x, params):
    """Pure-JAX reference matching the PyTorch forward (eval mode), mirroring
    the kernel's precision policy (bf16 MXU operands, f32 accumulation)."""
    B, T, D = x.shape
    H = params["w_emb"].shape[0]
    bf16, f32 = jnp.bfloat16, jnp.float32

    z = jnp.dot(x.astype(bf16), params["w_emb"].T.astype(bf16),
                preferred_element_type=f32) + params["b_emb"]
    mu = z.mean(-1, keepdims=True)
    var = ((z - mu) ** 2).mean(-1, keepdims=True)
    e = jnp.tanh((z - mu) * lax.rsqrt(var + 1e-5) * params["ln_g"]
                 + params["ln_b"])
    e_tm = jnp.transpose(e, (1, 0, 2))                  # (T, B, H)

    def cell(carry, x_t, wih, whh, b):
        h, c = carry
        gates = (jnp.dot(x_t.astype(bf16), wih.T.astype(bf16),
                         preferred_element_type=f32)
                 + jnp.dot(h.astype(bf16), whh.T.astype(bf16),
                           preferred_element_type=f32) + b)
        i, f, g, o = jnp.split(gates, 4, axis=-1)
        c = jax.nn.sigmoid(f) * c + jax.nn.sigmoid(i) * jnp.tanh(g)
        h = jax.nn.sigmoid(o) * jnp.tanh(c)
        return (h, c), h

    b_f = params["bih_f"] + params["bhh_f"]
    b_b = params["bih_b"] + params["bhh_b"]
    init = (jnp.zeros((B, H), f32), jnp.zeros((B, H), f32))
    (h_fwd, _), _ = lax.scan(
        lambda c_, xt: cell(c_, xt, params["wih_f"], params["whh_f"], b_f),
        init, e_tm)
    _, hb_seq = lax.scan(
        lambda c_, xt: cell(c_, xt, params["wih_b"], params["whh_b"], b_b),
        init, e_tm[::-1])
    h_bwd_last = hb_seq[0]          # reverse-direction output at original t=T-1
    return 0.5 * (h_fwd + h_bwd_last)


if __name__ == "__main__":
    B, T, D_in, H = 16, 8, 16, 32
    key = jax.random.PRNGKey(0)
    kx, kp = jax.random.split(key)
    x = jax.random.normal(kx, (B, T, D_in), jnp.float32)
    params = init_params(kp, D_in, H)

    # 2x2 grid: two batch blocks ("parallel") x two time chunks ("arbitrary").
    out = normalized_lstm_forward(x, params, time_chunk=4, batch_block=8)
    out = jax.block_until_ready(out)

    ref = reference_forward(x, params)
    np.testing.assert_allclose(np.asarray(out), np.asarray(ref),
                               rtol=2e-3, atol=2e-3)
    print("KERNEL_OK")
</pallas_src>

<mosaic_0001>
module attributes {stable_mosaic.version = 11 : i64} {
  func.func @normalized_lstm_kernel(%arg0: i32, %arg1: i32, %arg2: memref<1x32x16xbf16, #tpu.memory_space<vmem>>, %arg3: memref<16x32xbf16, #tpu.memory_space<vmem>>, %arg4: memref<1x32xf32, #tpu.memory_space<vmem>>, %arg5: memref<1x32xf32, #tpu.memory_space<vmem>>, %arg6: memref<1x32xf32, #tpu.memory_space<vmem>>, %arg7: memref<32x128xbf16, #tpu.memory_space<vmem>>, %arg8: memref<32x128xbf16, #tpu.memory_space<vmem>>, %arg9: memref<1x128xf32, #tpu.memory_space<vmem>>, %arg10: memref<32x128xbf16, #tpu.memory_space<vmem>>, %arg11: memref<1x128xf32, #tpu.memory_space<vmem>>, %arg12: memref<8x32xf32, #tpu.memory_space<vmem>>, %arg13: memref<32x128xf32, #tpu.memory_space<vmem>>, %arg14: memref<8x32xf32, #tpu.memory_space<vmem>>, %arg15: memref<8x32xf32, #tpu.memory_space<vmem>>) attributes {dimension_semantics = [#tpu.dimension_semantics<parallel>, #tpu.dimension_semantics<arbitrary>], iteration_bounds = array<i64: 2, 2>, scalar_prefetch = 0 : i64, scratch_operands = 3 : i64, tpu.core_type = #tpu.core_type<tc>, window_params = [{transform_indices = @transform_0, window_bounds = array<i64: 1, 32, 16>}, {pipeline_mode = #tpu.pipeline_mode<synchronous>, transform_indices = @transform_1, window_bounds = array<i64: 16, 32>}, {pipeline_mode = #tpu.pipeline_mode<synchronous>, transform_indices = @transform_2, window_bounds = array<i64: 1, 32>}, {pipeline_mode = #tpu.pipeline_mode<synchronous>, transform_indices = @transform_3, window_bounds = array<i64: 1, 32>}, {pipeline_mode = #tpu.pipeline_mode<synchronous>, transform_indices = @transform_4, window_bounds = array<i64: 1, 32>}, {pipeline_mode = #tpu.pipeline_mode<synchronous>, transform_indices = @transform_5, window_bounds = array<i64: 32, 128>}, {pipeline_mode = #tpu.pipeline_mode<synchronous>, transform_indices = @transform_6, window_bounds = array<i64: 32, 128>}, {pipeline_mode = #tpu.pipeline_mode<synchronous>, transform_indices = @transform_7, window_bounds = array<i64: 1, 128>}, {pipeline_mode = #tpu.pipeline_mode<synchronous>, transform_indices = @transform_8, window_bounds = array<i64: 32, 128>}, {pipeline_mode = #tpu.pipeline_mode<synchronous>, transform_indices = @transform_9, window_bounds = array<i64: 1, 128>}, {transform_indices = @transform_10, window_bounds = array<i64: 8, 32>}]} {
    %c0 = arith.constant 0 : index
    %c0_0 = arith.constant 0 : index
    %c0_1 = arith.constant 0 : index
    %0 = vector.load %arg2[%c0, %c0_0, %c0_1] : memref<1x32x16xbf16, #tpu.memory_space<vmem>>, vector<1x32x16xbf16>
    %1 = vector.shape_cast %0 : vector<1x32x16xbf16> to vector<32x16xbf16>
    %c0_2 = arith.constant 0 : index
    %c0_3 = arith.constant 0 : index
    %2 = vector.load %arg3[%c0_2, %c0_3] : memref<16x32xbf16, #tpu.memory_space<vmem>>, vector<16x32xbf16>
    %cst = arith.constant dense<0.000000e+00> : vector<32x32xf32>
    %3 = tpu.matmul %1, %2, %cst {dimension_numbers = #tpu.dot_dimension_numbers<[1], [0], [0], [1], [0, 0, 1, 1], [], []>} : vector<32x16xbf16>, vector<16x32xbf16>, vector<32x32xf32> -> vector<32x32xf32>
    %c0_4 = arith.constant 0 : index
    %c0_5 = arith.constant 0 : index
    %4 = vector.load %arg4[%c0_4, %c0_5] : memref<1x32xf32, #tpu.memory_space<vmem>>, vector<1x32xf32>
    %5 = vector.broadcast %4 : vector<1x32xf32> to vector<32x32xf32>
    %6 = arith.addf %3, %5 : vector<32x32xf32>
    %cst_6 = arith.constant dense<0.000000e+00> : vector<32xf32>
    %7 = vector.multi_reduction <add>, %6, %cst_6 [1] : vector<32x32xf32> to vector<32xf32>
    %8 = vector.shape_cast %7 : vector<32xf32> to vector<32x1xf32>
    %cst_7 = arith.constant 3.200000e+01 : f32
    %9 = vector.broadcast %cst_7 : f32 to vector<32x1xf32>
    %10 = arith.divf %8, %9 : vector<32x1xf32>
    %11 = vector.broadcast %10 : vector<32x1xf32> to vector<32x32xf32>
    %12 = arith.subf %6, %11 : vector<32x32xf32>
    %13 = arith.mulf %12, %12 : vector<32x32xf32>
    %cst_8 = arith.constant dense<0.000000e+00> : vector<32xf32>
    %14 = vector.multi_reduction <add>, %13, %cst_8 [1] : vector<32x32xf32> to vector<32xf32>
    %15 = vector.shape_cast %14 : vector<32xf32> to vector<32x1xf32>
    %cst_9 = arith.constant 3.200000e+01 : f32
    %16 = vector.broadcast %cst_9 : f32 to vector<32x1xf32>
    %17 = arith.divf %15, %16 : vector<32x1xf32>
    %18 = vector.broadcast %10 : vector<32x1xf32> to vector<32x32xf32>
    %19 = arith.subf %6, %18 : vector<32x32xf32>
    %cst_10 = arith.constant 9.99999974E-6 : f32
    %20 = vector.broadcast %cst_10 : f32 to vector<32x1xf32>
    %21 = arith.addf %17, %20 : vector<32x1xf32>
    %22 = math.rsqrt %21 : vector<32x1xf32>
    %23 = vector.broadcast %22 : vector<32x1xf32> to vector<32x32xf32>
    %24 = arith.mulf %19, %23 : vector<32x32xf32>
    %c0_11 = arith.constant 0 : index
    %c0_12 = arith.constant 0 : index
    %25 = vector.load %arg5[%c0_11, %c0_12] : memref<1x32xf32, #tpu.memory_space<vmem>>, vector<1x32xf32>
    %26 = vector.broadcast %25 : vector<1x32xf32> to vector<32x32xf32>
    %27 = arith.mulf %24, %26 : vector<32x32xf32>
    %c0_13 = arith.constant 0 : index
    %c0_14 = arith.constant 0 : index
    %28 = vector.load %arg6[%c0_13, %c0_14] : memref<1x32xf32, #tpu.memory_space<vmem>>, vector<1x32xf32>
    %29 = vector.broadcast %28 : vector<1x32xf32> to vector<32x32xf32>
    %30 = arith.addf %27, %29 : vector<32x32xf32>
    %31 = math.tanh %30 : vector<32x32xf32>
    %32 = arith.truncf %31 : vector<32x32xf32> to vector<32x32xbf16>
    %c0_15 = arith.constant 0 : index
    %c0_16 = arith.constant 0 : index
    %33 = vector.load %arg7[%c0_15, %c0_16] : memref<32x128xbf16, #tpu.memory_space<vmem>>, vector<32x128xbf16>
    %cst_17 = arith.constant dense<0.000000e+00> : vector<32x128xf32>
    %34 = tpu.matmul %32, %33, %cst_17 {dimension_numbers = #tpu.dot_dimension_numbers<[1], [0], [0], [1], [0, 0, 1, 1], [], []>} : vector<32x32xbf16>, vector<32x128xbf16>, vector<32x128xf32> -> vector<32x128xf32>
    %c0_18 = arith.constant 0 : index
    %c0_19 = arith.constant 0 : index
    %35 = vector.load %arg9[%c0_18, %c0_19] : memref<1x128xf32, #tpu.memory_space<vmem>>, vector<1x128xf32>
    %36 = vector.broadcast %35 : vector<1x128xf32> to vector<32x128xf32>
    %37 = arith.addf %34, %36 : vector<32x128xf32>
    %c0_20 = arith.constant 0 : index
    %c0_21 = arith.constant 0 : index
    %38 = vector.load %arg13[%c0_20, %c0_21] : memref<32x128xf32, #tpu.memory_space<vmem>>, vector<32x128xf32>
    tpu.vector_store %arg13[%c0_20, %c0_21], %37 {strides = array<i32>} : memref<32x128xf32, #tpu.memory_space<vmem>>, vector<32x128xf32>,
    %c0_i32 = arith.constant 0 : i32
    %39 = arith.cmpi eq, %arg1, %c0_i32 : i32
    %40 = arith.extui %39 : i1 to i32
    %c0_i32_22 = arith.constant 0 : i32
    %41 = arith.cmpi ne, %40, %c0_i32_22 : i32
    scf.if %41 {
      %cst_51 = arith.constant 0.000000e+00 : f32
      %142 = vector.broadcast %cst_51 : f32 to vector<8x32xf32>
      %c0_52 = arith.constant 0 : index
      %c0_53 = arith.constant 0 : index
      %143 = vector.load %arg14[%c0_52, %c0_53] : memref<8x32xf32, #tpu.memory_space<vmem>>, vector<8x32xf32>
      tpu.vector_store %arg14[%c0_52, %c0_53], %142 {strides = array<i32>} : memref<8x32xf32, #tpu.memory_space<vmem>>, vector<8x32xf32>,
      %cst_54 = arith.constant 0.000000e+00 : f32
      %144 = vector.broadcast %cst_54 : f32 to vector<8x32xf32>
      %c0_55 = arith.constant 0 : index
      %c0_56 = arith.constant 0 : index
      %145 = vector.load %arg15[%c0_55, %c0_56] : memref<8x32xf32, #tpu.memory_space<vmem>>, vector<8x32xf32>
      tpu.vector_store %arg15[%c0_55, %c0_56], %144 {strides = array<i32>} : memref<8x32xf32, #tpu.memory_space<vmem>>, vector<8x32xf32>,
    } else {
    }
    %c0_23 = arith.constant 0 : index
    %c0_24 = arith.constant 0 : index
    %42 = vector.load %arg8[%c0_23, %c0_24] : memref<32x128xbf16, #tpu.memory_space<vmem>>, vector<32x128xbf16>
    %c0_25 = arith.constant 0 : index
    %c0_26 = arith.constant 0 : index
    %43 = vector.load %arg14[%c0_25, %c0_26] : memref<8x32xf32, #tpu.memory_space<vmem>>, vector<8x32xf32>
    %c0_27 = arith.constant 0 : index
    %c0_28 = arith.constant 0 : index
    %44 = vector.load %arg15[%c0_27, %c0_28] : memref<8x32xf32, #tpu.memory_space<vmem>>, vector<8x32xf32>
    %c0_i32_29 = arith.constant 0 : i32
    %c8_i32 = arith.constant 8 : i32
    %45 = arith.muli %c0_i32_29, %c8_i32 : i32
    %46 = tpu.assume_multiple %45, 8 : i32
    %47 = arith.index_cast %46 : i32 to index
    %c0_30 = arith.constant 0 : index
    %48 = vector.load %arg13[%47, %c0_30] : memref<32x128xf32, #tpu.memory_space<vmem>>, vector<8x128xf32>
    %49 = arith.truncf %43 : vector<8x32xf32> to vector<8x32xbf16>
    %cst_31 = arith.constant dense<0.000000e+00> : vector<8x128xf32>
    %50 = tpu.matmul %49, %42, %cst_31 {dimension_numbers = #tpu.dot_dimension_numbers<[1], [0], [0], [1], [0, 0, 1, 1], [], []>} : vector<8x32xbf16>, vector<32x128xbf16>, vector<8x128xf32> -> vector<8x128xf32>
    %51 = arith.addf %48, %50 : vector<8x128xf32>
    %52 = vector.extract_strided_slice %51 {offsets = [0, 0], sizes = [8, 96], strides = [1, 1]} : vector<8x128xf32> to vector<8x96xf32>
    %53 = arith.negf %52 : vector<8x96xf32>
    %54 = math.exp %53 : vector<8x96xf32>
    %cst_32 = arith.constant 1.000000e+00 : f32
    %55 = vector.broadcast %cst_32 : f32 to vector<8x96xf32>
    %56 = arith.addf %55, %54 : vector<8x96xf32>
    %57 = arith.divf %55, %56 : vector<8x96xf32>
    %58 = vector.extract_strided_slice %57 {offsets = [0, 0], sizes = [8, 32], strides = [1, 1]} : vector<8x96xf32> to vector<8x32xf32>
    %59 = vector.extract_strided_slice %57 {offsets = [0, 32], sizes = [8, 32], strides = [1, 1]} : vector<8x96xf32> to vector<8x32xf32>
    %60 = vector.extract_strided_slice %57 {offsets = [0, 64], sizes = [8, 32], strides = [1, 1]} : vector<8x96xf32> to vector<8x32xf32>
    %61 = vector.extract_strided_slice %51 {offsets = [0, 96], sizes = [8, 32], strides = [1, 1]} : vector<8x128xf32> to vector<8x32xf32>
    %62 = math.tanh %61 : vector<8x32xf32>
    %63 = arith.mulf %59, %44 : vector<8x32xf32>
    %64 = arith.mulf %58, %62 : vector<8x32xf32>
    %65 = arith.addf %63, %64 : vector<8x32xf32>
    %66 = math.tanh %65 : vector<8x32xf32>
    %67 = arith.mulf %60, %66 : vector<8x32xf32>
    %c1_i32 = arith.constant 1 : i32
    %c8_i32_33 = arith.constant 8 : i32
    %68 = arith.muli %c1_i32, %c8_i32_33 : i32
    %69 = tpu.assume_multiple %68, 8 : i32
    %70 = arith.index_cast %69 : i32 to index
    %c0_34 = arith.constant 0 : index
    %71 = vector.load %arg13[%70, %c0_34] : memref<32x128xf32, #tpu.memory_space<vmem>>, vector<8x128xf32>
    %72 = arith.truncf %67 : vector<8x32xf32> to vector<8x32xbf16>
    %cst_35 = arith.constant dense<0.000000e+00> : vector<8x128xf32>
    %73 = tpu.matmul %72, %42, %cst_35 {dimension_numbers = #tpu.dot_dimension_numbers<[1], [0], [0], [1], [0, 0, 1, 1], [], []>} : vector<8x32xbf16>, vector<32x128xbf16>, vector<8x128xf32> -> vector<8x128xf32>
    %74 = arith.addf %71, %73 : vector<8x128xf32>
    %75 = vector.extract_strided_slice %74 {offsets = [0, 0], sizes = [8, 96], strides = [1, 1]} : vector<8x128xf32> to vector<8x96xf32>
    %76 = arith.negf %75 : vector<8x96xf32>
    %77 = math.exp %76 : vector<8x96xf32>
    %cst_36 = arith.constant 1.000000e+00 : f32
    %78 = vector.broadcast %cst_36 : f32 to vector<8x96xf32>
    %79 = arith.addf %78, %77 : vector<8x96xf32>
    %80 = arith.divf %78, %79 : vector<8x96xf32>
    %81 = vector.extract_strided_slice %80 {offsets = [0, 0], sizes = [8, 32], strides = [1, 1]} : vector<8x96xf32> to vector<8x32xf32>
    %82 = vector.extract_strided_slice %80 {offsets = [0, 32], sizes = [8, 32], strides = [1, 1]} : vector<8x96xf32> to vector<8x32xf32>
    %83 = vector.extract_strided_slice %80 {offsets = [0, 64], sizes = [8, 32], strides = [1, 1]} : vector<8x96xf32> to vector<8x32xf32>
    %84 = vector.extract_strided_slice %74 {offsets = [0, 96], sizes = [8, 32], strides = [1, 1]} : vector<8x128xf32> to vector<8x32xf32>
    %85 = math.tanh %84 : vector<8x32xf32>
    %86 = arith.mulf %82, %65 : vector<8x32xf32>
    %87 = arith.mulf %81, %85 : vector<8x32xf32>
    %88 = arith.addf %86, %87 : vector<8x32xf32>
    %89 = math.tanh %88 : vector<8x32xf32>
    %90 = arith.mulf %83, %89 : vector<8x32xf32>
    %c2_i32 = arith.constant 2 : i32
    %c8_i32_37 = arith.constant 8 : i32
    %91 = arith.muli %c2_i32, %c8_i32_37 : i32
    %92 = tpu.assume_multiple %91, 8 : i32
    %93 = arith.index_cast %92 : i32 to index
    %c0_38 = arith.constant 0 : index
    %94 = vector.load %arg13[%93, %c0_38] : memref<32x128xf32, #tpu.memory_space<vmem>>, vector<8x128xf32>
    %95 = arith.truncf %90 : vector<8x32xf32> to vector<8x32xbf16>
    %cst_39 = arith.constant dense<0.000000e+00> : vector<8x128xf32>
    %96 = tpu.matmul %95, %42, %cst_39 {dimension_numbers = #tpu.dot_dimension_numbers<[1], [0], [0], [1], [0, 0, 1, 1], [], []>} : vector<8x32xbf16>, vector<32x128xbf16>, vector<8x128xf32> -> vector<8x128xf32>
    %97 = arith.addf %94, %96 : vector<8x128xf32>
    %98 = vector.extract_strided_slice %97 {offsets = [0, 0], sizes = [8, 96], strides = [1, 1]} : vector<8x128xf32> to vector<8x96xf32>
    %99 = arith.negf %98 : vector<8x96xf32>
    %100 = math.exp %99 : vector<8x96xf32>
    %cst_40 = arith.constant 1.000000e+00 : f32
    %101 = vector.broadcast %cst_40 : f32 to vector<8x96xf32>
    %102 = arith.addf %101, %100 : vector<8x96xf32>
    %103 = arith.divf %101, %102 : vector<8x96xf32>
    %104 = vector.extract_strided_slice %103 {offsets = [0, 0], sizes = [8, 32], strides = [1, 1]} : vector<8x96xf32> to vector<8x32xf32>
    %105 = vector.extract_strided_slice %103 {offsets = [0, 32], sizes = [8, 32], strides = [1, 1]} : vector<8x96xf32> to vector<8x32xf32>
    %106 = vector.extract_strided_slice %103 {offsets = [0, 64], sizes = [8, 32], strides = [1, 1]} : vector<8x96xf32> to vector<8x32xf32>
    %107 = vector.extract_strided_slice %97 {offsets = [0, 96], sizes = [8, 32], strides = [1, 1]} : vector<8x128xf32> to vector<8x32xf32>
    %108 = math.tanh %107 : vector<8x32xf32>
    %109 = arith.mulf %105, %88 : vector<8x32xf32>
    %110 = arith.mulf %104, %108 : vector<8x32xf32>
    %111 = arith.addf %109, %110 : vector<8x32xf32>
    %112 = math.tanh %111 : vector<8x32xf32>
    %113 = arith.mulf %106, %112 : vector<8x32xf32>
    %c3_i32 = arith.constant 3 : i32
    %c8_i32_41 = arith.constant 8 : i32
    %114 = arith.muli %c3_i32, %c8_i32_41 : i32
    %115 = tpu.assume_multiple %114, 8 : i32
    %116 = arith.index_cast %115 : i32 to index
    %c0_42 = arith.constant 0 : index
    %117 = vector.load %arg13[%116, %c0_42] : memref<32x128xf32, #tpu.memory_space<vmem>>, vector<8x128xf32>
    %118 = arith.truncf %113 : vector<8x32xf32> to vector<8x32xbf16>
    %cst_43 = arith.constant dense<0.000000e+00> : vector<8x128xf32>
    %119 = tpu.matmul %118, %42, %cst_43 {dimension_numbers = #tpu.dot_dimension_numbers<[1], [0], [0], [1], [0, 0, 1, 1], [], []>} : vector<8x32xbf16>, vector<32x128xbf16>, vector<8x128xf32> -> vector<8x128xf32>
    %120 = arith.addf %117, %119 : vector<8x128xf32>
    %121 = vector.extract_strided_slice %120 {offsets = [0, 0], sizes = [8, 96], strides = [1, 1]} : vector<8x128xf32> to vector<8x96xf32>
    %122 = arith.negf %121 : vector<8x96xf32>
    %123 = math.exp %122 : vector<8x96xf32>
    %cst_44 = arith.constant 1.000000e+00 : f32
    %124 = vector.broadcast %cst_44 : f32 to vector<8x96xf32>
    %125 = arith.addf %124, %123 : vector<8x96xf32>
    %126 = arith.divf %124, %125 : vector<8x96xf32>
    %127 = vector.extract_strided_slice %126 {offsets = [0, 0], sizes = [8, 32], strides = [1, 1]} : vector<8x96xf32> to vector<8x32xf32>
    %128 = vector.extract_strided_slice %126 {offsets = [0, 32], sizes = [8, 32], strides = [1, 1]} : vector<8x96xf32> to vector<8x32xf32>
    %129 = vector.extract_strided_slice %126 {offsets = [0, 64], sizes = [8, 32], strides = [1, 1]} : vector<8x96xf32> to vector<8x32xf32>
    %130 = vector.extract_strided_slice %120 {offsets = [0, 96], sizes = [8, 32], strides = [1, 1]} : vector<8x128xf32> to vector<8x32xf32>
    %131 = math.tanh %130 : vector<8x32xf32>
    %132 = arith.mulf %128, %111 : vector<8x32xf32>
    %133 = arith.mulf %127, %131 : vector<8x32xf32>
    %134 = arith.addf %132, %133 : vector<8x32xf32>
    %135 = math.tanh %134 : vector<8x32xf32>
    %136 = arith.mulf %129, %135 : vector<8x32xf32>
    %c4_i32 = arith.constant 4 : i32
    %c0_45 = arith.constant 0 : index
    %c0_46 = arith.constant 0 : index
    %137 = vector.load %arg14[%c0_45, %c0_46] : memref<8x32xf32, #tpu.memory_space<vmem>>, vector<8x32xf32>
    tpu.vector_store %arg14[%c0_45, %c0_46], %136 {strides = array<i32>} : memref<8x32xf32, #tpu.memory_space<vmem>>, vector<8x32xf32>,
    %c0_47 = arith.constant 0 : index
    %c0_48 = arith.constant 0 : index
    %138 = vector.load %arg15[%c0_47, %c0_48] : memref<8x32xf32, #tpu.memory_space<vmem>>, vector<8x32xf32>
    tpu.vector_store %arg15[%c0_47, %c0_48], %134 {strides = array<i32>} : memref<8x32xf32, #tpu.memory_space<vmem>>, vector<8x32xf32>,
    %c1_i32_49 = arith.constant 1 : i32
    %139 = arith.cmpi eq, %arg1, %c1_i32_49 : i32
    %140 = arith.extui %139 : i1 to i32
    %c0_i32_50 = arith.constant 0 : i32
    %141 = arith.cmpi ne, %140, %c0_i32_50 : i32
    scf.if %141 {
      %142 = vector.extract_strided_slice %31 {offsets = [24, 0], sizes = [8, 32], strides = [1, 1]} : vector<32x32xf32> to vector<8x32xf32>
      %143 = arith.truncf %142 : vector<8x32xf32> to vector<8x32xbf16>
      %c0_51 = arith.constant 0 : index
      %c0_52 = arith.constant 0 : index
      %144 = vector.load %arg10[%c0_51, %c0_52] : memref<32x128xbf16, #tpu.memory_space<vmem>>, vector<32x128xbf16>
      %cst_53 = arith.constant dense<0.000000e+00> : vector<8x128xf32>
      %145 = tpu.matmul %143, %144, %cst_53 {dimension_numbers = #tpu.dot_dimension_numbers<[1], [0], [0], [1], [0, 0, 1, 1], [], []>} : vector<8x32xbf16>, vector<32x128xbf16>, vector<8x128xf32> -> vector<8x128xf32>
      %c0_54 = arith.constant 0 : index
      %c0_55 = arith.constant 0 : index
      %146 = vector.load %arg11[%c0_54, %c0_55] : memref<1x128xf32, #tpu.memory_space<vmem>>, vector<1x128xf32>
      %147 = vector.broadcast %146 : vector<1x128xf32> to vector<8x128xf32>
      %148 = arith.addf %145, %147 : vector<8x128xf32>
      %cst_56 = arith.constant 0.000000e+00 : f32
      %149 = vector.broadcast %cst_56 : f32 to vector<8x32xf32>
      %150 = vector.extract_strided_slice %148 {offsets = [0, 0], sizes = [8, 96], strides = [1, 1]} : vector<8x128xf32> to vector<8x96xf32>
      %151 = arith.negf %150 : vector<8x96xf32>
      %152 = math.exp %151 : vector<8x96xf32>
      %cst_57 = arith.constant 1.000000e+00 : f32
      %153 = vector.broadcast %cst_57 : f32 to vector<8x96xf32>
      %154 = arith.addf %153, %152 : vector<8x96xf32>
      %155 = arith.divf %153, %154 : vector<8x96xf32>
      %156 = vector.extract_strided_slice %155 {offsets = [0, 0], sizes = [8, 32], strides = [1, 1]} : vector<8x96xf32> to vector<8x32xf32>
      %157 = vector.extract_strided_slice %155 {offsets = [0, 32], sizes = [8, 32], strides = [1, 1]} : vector<8x96xf32> to vector<8x32xf32>
      %158 = vector.extract_strided_slice %155 {offsets = [0, 64], sizes = [8, 32], strides = [1, 1]} : vector<8x96xf32> to vector<8x32xf32>
      %159 = vector.extract_strided_slice %148 {offsets = [0, 96], sizes = [8, 32], strides = [1, 1]} : vector<8x128xf32> to vector<8x32xf32>
      %160 = math.tanh %159 : vector<8x32xf32>
      %161 = arith.mulf %157, %149 : vector<8x32xf32>
      %162 = arith.mulf %156, %160 : vector<8x32xf32>
      %163 = arith.addf %161, %162 : vector<8x32xf32>
      %164 = math.tanh %163 : vector<8x32xf32>
      %165 = arith.mulf %158, %164 : vector<8x32xf32>
      %166 = arith.addf %136, %165 : vector<8x32xf32>
      %cst_58 = arith.constant 5.000000e-01 : f32
      %167 = vector.broadcast %cst_58 : f32 to vector<8x32xf32>
      %168 = arith.mulf %167, %166 : vector<8x32xf32>
      %c0_59 = arith.constant 0 : index
      %c0_60 = arith.constant 0 : index
      %169 = vector.load %arg12[%c0_59, %c0_60] : memref<8x32xf32, #tpu.memory_space<vmem>>, vector<8x32xf32>
      tpu.vector_store %arg12[%c0_59, %c0_60], %168 {strides = array<i32>} : memref<8x32xf32, #tpu.memory_space<vmem>>, vector<8x32xf32>,
    } else {
    }
    return
  }
  func.func @transform_0(%arg0: i32, %arg1: i32) -> (i32, i32, i32) {
    %c0_i32 = arith.constant 0 : i32
    %c0_i32_0 = arith.constant 0 : i32
    return %arg0, %arg1, %c0_i32 : i32, i32, i32
  }
  func.func @transform_1(%arg0: i32, %arg1: i32) -> (i32, i32) {
    %c0_i32 = arith.constant 0 : i32
    %c0_i32_0 = arith.constant 0 : i32
    %c0_i32_1 = arith.constant 0 : i32
    return %c0_i32, %c0_i32_0 : i32, i32
  }
  func.func @transform_2(%arg0: i32, %arg1: i32) -> (i32, i32) {
    %c0_i32 = arith.constant 0 : i32
    %c0_i32_0 = arith.constant 0 : i32
    %c0_i32_1 = arith.constant 0 : i32
    return %c0_i32, %c0_i32_0 : i32, i32
  }
  func.func @transform_3(%arg0: i32, %arg1: i32) -> (i32, i32) {
    %c0_i32 = arith.constant 0 : i32
    %c0_i32_0 = arith.constant 0 : i32
    %c0_i32_1 = arith.constant 0 : i32
    return %c0_i32, %c0_i32_0 : i32, i32
  }
  func.func @transform_4(%arg0: i32, %arg1: i32) -> (i32, i32) {
    %c0_i32 = arith.constant 0 : i32
    %c0_i32_0 = arith.constant 0 : i32
    %c0_i32_1 = arith.constant 0 : i32
    return %c0_i32, %c0_i32_0 : i32, i32
  }
  func.func @transform_5(%arg0: i32, %arg1: i32) -> (i32, i32) {
    %c0_i32 = arith.constant 0 : i32
    %c0_i32_0 = arith.constant 0 : i32
    %c0_i32_1 = arith.constant 0 : i32
    return %c0_i32, %c0_i32_0 : i32, i32
  }
  func.func @transform_6(%arg0: i32, %arg1: i32) -> (i32, i32) {
    %c0_i32 = arith.constant 0 : i32
    %c0_i32_0 = arith.constant 0 : i32
    %c0_i32_1 = arith.constant 0 : i32
    return %c0_i32, %c0_i32_0 : i32, i32
  }
  func.func @transform_7(%arg0: i32, %arg1: i32) -> (i32, i32) {
    %c0_i32 = arith.constant 0 : i32
    %c0_i32_0 = arith.constant 0 : i32
    %c0_i32_1 = arith.constant 0 : i32
    return %c0_i32, %c0_i32_0 : i32, i32
  }
  func.func @transform_8(%arg0: i32, %arg1: i32) -> (i32, i32) {
    %c0_i32 = arith.constant 0 : i32
    %c0_i32_0 = arith.constant 0 : i32
    %c0_i32_1 = arith.constant 0 : i32
    return %c0_i32, %c0_i32_0 : i32, i32
  }
  func.func @transform_9(%arg0: i32, %arg1: i32) -> (i32, i32) {
    %c0_i32 = arith.constant 0 : i32
    %c0_i32_0 = arith.constant 0 : i32
    %c0_i32_1 = arith.constant 0 : i32
    return %c0_i32, %c0_i32_0 : i32, i32
  }
  func.func @transform_10(%arg0: i32, %arg1: i32) -> (i32, i32) {
    %c0_i32 = arith.constant 0 : i32
    %c0_i32_0 = arith.constant 0 : i32
    return %arg0, %c0_i32 : i32, i32
  }
}

</mosaic_0001>

<llo_original>
// kernel: tpu_custom_call.1
$region0: #{tpu_custom_call.1}
  #allocation0 [shape = 'u32[]', space=smem, size = 0x4, offset = 0x4, fixed_abs, tag = 'smem constant byte address 0x4 - core index']
  #allocation1 [shape = 'u32[144,128]{1,0:T(1,128)}', space=vmem, size = 0x12000, scoped, tag = 'internal scratch']
  #allocation2 [shape = 'f32[32,128]{1,0:T(8,128)}', space=vmem, size = 0x4000, scoped, tag = 'scratch operand']
  #allocation3 [shape = 'f32[8,32]{1,0:T(8,128)}', space=vmem, size = 0x1000, scoped, tag = 'scratch operand']
  #allocation4 [shape = 'f32[8,32]{1,0:T(8,128)}', space=vmem, size = 0x1000, scoped, tag = 'scratch operand']
  %s0 = inlined_call_operand.vmem [shape: bf16[2,64,16], index: 0, kind: input, shape index: {}]
  %s1 = inlined_call_operand.vmem [shape: bf16[16,32], index: 1, kind: input, shape index: {}]
  %s2 = inlined_call_operand.vmem [shape: f32[1,32], index: 2, kind: input, shape index: {}]
  %s3 = inlined_call_operand.vmem [shape: f32[1,32], index: 3, kind: input, shape index: {}]
  %s4 = inlined_call_operand.vmem [shape: f32[1,32], index: 4, kind: input, shape index: {}]
  %s5 = inlined_call_operand.vmem [shape: bf16[32,128], index: 5, kind: input, shape index: {}]
  %s6 = inlined_call_operand.vmem [shape: bf16[32,128], index: 6, kind: input, shape index: {}]
  %s7 = inlined_call_operand.vmem [shape: f32[1,128], index: 7, kind: input, shape index: {}]
  %s8 = inlined_call_operand.vmem [shape: bf16[32,128], index: 8, kind: input, shape index: {}]
  %s9 = inlined_call_operand.vmem [shape: f32[1,128], index: 9, kind: input, shape index: {}]
  %s10 = inlined_call_operand.hbm [shape: f32[16,32], index: 10, kind: output, shape index: {}]
  %s11 = sld [smem:[#allocation0]]
  $region81: #{tpu_custom_call.1} parent=0
    _
  %s13 = ssub.s32 1, %s11
  %s14 = scalar_select 0, %s13, %s11
  $region1: #{tpu_custom_call.1} parent=0
    #allocation5 [shape = 'u8[8192]{0}', space=vmem, size = 0x2000, scoped, tag = 'output window, operand 0']
    #allocation6 [shape = 's32[2]{0}', space=sflag, size = 0x8, scoped, tag = 'scoped memory for tpu_custom_call.1']
    %15 = vsyncpa [#allocation6], 0
    %s16 = scalar_lea.sflag [#allocation6], 1
    %17 = vsyncpa %s16, 0
    loop: start=0, step=1, limit=6
    $region2: #{tpu_custom_call.1} parent=1 // loop_pre_header
      _
    $region3: #{tpu_custom_call.1} parent=1 // loop_header
      %s19 = sphi 0, %s23
      %p20 = scmp.ge.s32.totalorder %s19, 6
      %s26 = sphi 0, %s38
      %s27 = sphi 0, %s34
      %s28 = sphi 0, %s26
      %s29 = sphi 0, %s27
      %s30 = sphi 0, %s28
      %s31 = sphi 0, %s29
      %s43 = sphi 0, %s45
      %s46 = sphi 0, %s43
      %s47 = sphi 0, %s46
      %s63 = sphi 0, %s47
      %s67 = sphi 0, %s67
      %s69 = sphi 0, %s67
      %s70 = sphi 0, %s69
      %s84 = sphi 0, %s70
      %s88 = sphi 0, %s88
      %s90 = sphi 0, %s88
      %s91 = sphi 0, %s90
      %s105 = sphi 0, %s91
      %s109 = sphi 0, %s109
      %s111 = sphi 0, %s109
      %s112 = sphi 0, %s111
      %s126 = sphi 0, %s112
      %s130 = sphi 0, %s130
      %s132 = sphi 0, %s130
      %s133 = sphi 0, %s132
      %s147 = sphi 0, %s133
      %s151 = sphi 0, %s151
      %s153 = sphi 0, %s151
      %s154 = sphi 0, %s153
      %s168 = sphi 0, %s154
      %s172 = sphi 0, %s172
      %s174 = sphi 0, %s172
      %s175 = sphi 0, %s174
      %s189 = sphi 0, %s175
      %s193 = sphi 0, %s193
      %s195 = sphi 0, %s193
      %s196 = sphi 0, %s195
      %s210 = sphi 0, %s196
      %s214 = sphi 0, %s214
      %s216 = sphi 0, %s214
      %s217 = sphi 0, %s216
      %s231 = sphi 0, %s217
      %s235 = sphi 0, %s235
      %s237 = sphi 0, %s235
      %s238 = sphi 0, %s237
      %s252 = sphi 0, %s238
      %s258 = sphi 0, %s260
      %s261 = sphi 0, %s258
      %s262 = sphi 0, %s261
      %s278 = sphi 0, %s262
    $region4: #{tpu_custom_call.1} parent=1 // loop_header_branch
      %22 = sbr.rel (%p20) target = $region8
    $region5: #{tpu_custom_call.1} parent=1 // loop_body
      %s24 = ssub.s32 %s19, 1
      %s25 = ssub.s32 %s19, 2
      %s32 = sadd.s32 1, %s27
      %p33 = scmp.ge.s32.totalorder %s32, 2
      %s34 = scalar_select %p33, 0, %s32
      %s35 = sadd.s32 1, %s26
      %s36 = scalar_select %p33, %s35, %s26
      %p37 = scmp.ge.s32.totalorder %s36, 2
      %s38 = scalar_select %p37, 0, %s36
      %s39 = ssub.s32 %s26, %s38
      %s40 = ssub.s32 %s27, %s34
      %s41 = sor.u32 %s39, %s40
      %p42 = scmp.eq.s32.totalorder %s41, 0
      %s44 = sadd.s32 %s43, 1
      %s45 = scalar_select %p42, %s43, %s44
      %p48 = pneg %p42
      %p49 = scmp.eq.s32.totalorder %s19, 3
      %p50 = por %p48, %p49
      %p51 = scmp.ne.s32.totalorder %s43, %s46
      %p52 = scmp.eq.s32.totalorder %s19, 0
      %p53 = por %p51, %p52
      %p54 = scmp.ne.s32.totalorder %s43, %s46
      %p55 = scmp.eq.s32.totalorder %s24, 3
      %p56 = por %p54, %p55
      %p57 = scmp.ne.s32.totalorder %s46, %s47
      %p58 = scmp.eq.s32.totalorder %s24, 0
      %p59 = por %p57, %p58
      %p60 = scmp.ne.s32.totalorder %s46, %s47
      %p61 = scmp.eq.s32.totalorder %s25, 3
      %p62 = por %p60, %p61
      %p64 = scmp.ne.s32.totalorder %s47, %s63
      %p65 = scmp.eq.s32.totalorder %s25, 0
      %p66 = por %p64, %p65
      %s68 = sadd.s32 %s67, 1
      %p71 = scmp.eq.s32.totalorder %s19, 3
      %p72 = scmp.ne.s32.totalorder %s67, %s69
      %p73 = scmp.eq.s32.totalorder %s19, 0
      %p74 = por %p72, %p73
      %p75 = scmp.ne.s32.totalorder %s67, %s69
      %p76 = scmp.eq.s32.totalorder %s24, 3
      %p77 = por %p75, %p76
      %p78 = scmp.ne.s32.totalorder %s69, %s70
      %p79 = scmp.eq.s32.totalorder %s24, 0
      %p80 = por %p78, %p79
      %p81 = scmp.ne.s32.totalorder %s69, %s70
      %p82 = scmp.eq.s32.totalorder %s25, 3
      %p83 = por %p81, %p82
      %p85 = scmp.ne.s32.totalorder %s70, %s84
      %p86 = scmp.eq.s32.totalorder %s25, 0
      %p87 = por %p85, %p86
      %s89 = sadd.s32 %s88, 1
      %p92 = scmp.eq.s32.totalorder %s19, 3
      %p93 = scmp.ne.s32.totalorder %s88, %s90
      %p94 = scmp.eq.s32.totalorder %s19, 0
      %p95 = por %p93, %p94
      %p96 = scmp.ne.s32.totalorder %s88, %s90
      %p97 = scmp.eq.s32.totalorder %s24, 3
      %p98 = por %p96, %p97
      %p99 = scmp.ne.s32.totalorder %s90, %s91
      %p100 = scmp.eq.s32.totalorder %s24, 0
      %p101 = por %p99, %p100
      %p102 = scmp.ne.s32.totalorder %s90, %s91
      %p103 = scmp.eq.s32.totalorder %s25, 3
      %p104 = por %p102, %p103
      %p106 = scmp.ne.s32.totalorder %s91, %s105
      %p107 = scmp.eq.s32.totalorder %s25, 0
      %p108 = por %p106, %p107
      %s110 = sadd.s32 %s109, 1
      %p113 = scmp.eq.s32.totalorder %s19, 3
      %p114 = scmp.ne.s32.totalorder %s109, %s111
      %p115 = scmp.eq.s32.totalorder %s19, 0
      %p116 = por %p114, %p115
      %p117 = scmp.ne.s32.totalorder %s109, %s111
      %p118 = scmp.eq.s32.totalorder %s24, 3
      %p119 = por %p117, %p118
      %p120 = scmp.ne.s32.totalorder %s111, %s112
      %p121 = scmp.eq.s32.totalorder %s24, 0
      %p122 = por %p120, %p121
      %p123 = scmp.ne.s32.totalorder %s111, %s112
      %p124 = scmp.eq.s32.totalorder %s25, 3
      %p125 = por %p123, %p124
      %p127 = scmp.ne.s32.totalorder %s112, %s126
      %p128 = scmp.eq.s32.totalorder %s25, 0
      %p129 = por %p127, %p128
      %s131 = sadd.s32 %s130, 1
      %p134 = scmp.eq.s32.totalorder %s19, 3
      %p135 = scmp.ne.s32.totalorder %s130, %s132
      %p136 = scmp.eq.s32.totalorder %s19, 0
      %p137 = por %p135, %p136
      %p138 = scmp.ne.s32.totalorder %s130, %s132
      %p139 = scmp.eq.s32.totalorder %s24, 3
      %p140 = por %p138, %p139
      %p141 = scmp.ne.s32.totalorder %s132, %s133
      %p142 = scmp.eq.s32.totalorder %s24, 0
      %p143 = por %p141, %p142
      %p144 = scmp.ne.s32.totalorder %s132, %s133
      %p145 = scmp.eq.s32.totalorder %s25, 3
      %p146 = por %p144, %p145
      %p148 = scmp.ne.s32.totalorder %s133, %s147
      %p149 = scmp.eq.s32.totalorder %s25, 0
      %p150 = por %p148, %p149
      %s152 = sadd.s32 %s151, 1
      %p155 = scmp.eq.s32.totalorder %s19, 3
      %p156 = scmp.ne.s32.totalorder %s151, %s153
      %p157 = scmp.eq.s32.totalorder %s19, 0
      %p158 = por %p156, %p157
      %p159 = scmp.ne.s32.totalorder %s151, %s153
      %p160 = scmp.eq.s32.totalorder %s24, 3
      %p161 = por %p159, %p160
      %p162 = scmp.ne.s32.totalorder %s153, %s154
      %p163 = scmp.eq.s32.totalorder %s24, 0
      %p164 = por %p162, %p163
      %p165 = scmp.ne.s32.totalorder %s153, %s154
      %p166 = scmp.eq.s32.totalorder %s25, 3
      %p167 = por %p165, %p166
      %p169 = scmp.ne.s32.totalorder %s154, %s168
      %p170 = scmp.eq.s32.totalorder %s25, 0
      %p171 = por %p169, %p170
      %s173 = sadd.s32 %s172, 1
      %p176 = scmp.eq.s32.totalorder %s19, 3
      %p177 = scmp.ne.s32.totalorder %s172, %s174
      %p178 = scmp.eq.s32.totalorder %s19, 0
      %p179 = por %p177, %p178
      %p180 = scmp.ne.s32.totalorder %s172, %s174
      %p181 = scmp.eq.s32.totalorder %s24, 3
      %p182 = por %p180, %p181
      %p183 = scmp.ne.s32.totalorder %s174, %s175
      %p184 = scmp.eq.s32.totalorder %s24, 0
      %p185 = por %p183, %p184
      %p186 = scmp.ne.s32.totalorder %s174, %s175
      %p187 = scmp.eq.s32.totalorder %s25, 3
      %p188 = por %p186, %p187
      %p190 = scmp.ne.s32.totalorder %s175, %s189
      %p191 = scmp.eq.s32.totalorder %s25, 0
      %p192 = por %p190, %p191
      %s194 = sadd.s32 %s193, 1
      %p197 = scmp.eq.s32.totalorder %s19, 3
      %p198 = scmp.ne.s32.totalorder %s193, %s195
      %p199 = scmp.eq.s32.totalorder %s19, 0
      %p200 = por %p198, %p199
      %p201 = scmp.ne.s32.totalorder %s193, %s195
      %p202 = scmp.eq.s32.totalorder %s24, 3
      %p203 = por %p201, %p202
      %p204 = scmp.ne.s32.totalorder %s195, %s196
      %p205 = scmp.eq.s32.totalorder %s24, 0
      %p206 = por %p204, %p205
      %p207 = scmp.ne.s32.totalorder %s195, %s196
      %p208 = scmp.eq.s32.totalorder %s25, 3
      %p209 = por %p207, %p208
      %p211 = scmp.ne.s32.totalorder %s196, %s210
      %p212 = scmp.eq.s32.totalorder %s25, 0
      %p213 = por %p211, %p212
      %s215 = sadd.s32 %s214, 1
      %p218 = scmp.eq.s32.totalorder %s19, 3
      %p219 = scmp.ne.s32.totalorder %s214, %s216
      %p220 = scmp.eq.s32.totalorder %s19, 0
      %p221 = por %p219, %p220
      %p222 = scmp.ne.s32.totalorder %s214, %s216
      %p223 = scmp.eq.s32.totalorder %s24, 3
      %p224 = por %p222, %p223
      %p225 = scmp.ne.s32.totalorder %s216, %s217
      %p226 = scmp.eq.s32.totalorder %s24, 0
      %p227 = por %p225, %p226
      %p228 = scmp.ne.s32.totalorder %s216, %s217
      %p229 = scmp.eq.s32.totalorder %s25, 3
      %p230 = por %p228, %p229
      %p232 = scmp.ne.s32.totalorder %s217, %s231
      %p233 = scmp.eq.s32.totalorder %s25, 0
      %p234 = por %p232, %p233
      %s236 = sadd.s32 %s235, 1
      %p239 = scmp.eq.s32.totalorder %s19, 3
      %p240 = scmp.ne.s32.totalorder %s235, %s237
      %p241 = scmp.eq.s32.totalorder %s19, 0
      %p242 = por %p240, %p241
      %p243 = scmp.ne.s32.totalorder %s235, %s237
      %p244 = scmp.eq.s32.totalorder %s24, 3
      %p245 = por %p243, %p244
      %p246 = scmp.ne.s32.totalorder %s237, %s238
      %p247 = scmp.eq.s32.totalorder %s24, 0
      %p248 = por %p246, %p247
      %p249 = scmp.ne.s32.totalorder %s237, %s238
      %p250 = scmp.eq.s32.totalorder %s25, 3
      %p251 = por %p249, %p250
      %p253 = scmp.ne.s32.totalorder %s238, %s252
      %p254 = scmp.eq.s32.totalorder %s25, 0
      %p255 = por %p253, %p254
      %s256 = ssub.s32 %s26, %s38
      %p257 = scmp.eq.s32.totalorder %s256, 0
      %s259 = sadd.s32 %s258, 1
      %s260 = scalar_select %p257, %s258, %s259
      %p263 = pneg %p257
      %p264 = scmp.eq.s32.totalorder %s19, 3
      %p265 = por %p263, %p264
      %p266 = scmp.ne.s32.totalorder %s258, %s261
      %p267 = scmp.eq.s32.totalorder %s19, 0
      %p268 = por %p266, %p267
      %p269 = scmp.ne.s32.totalorder %s258, %s261
      %p270 = scmp.eq.s32.totalorder %s24, 3
      %p271 = por %p269, %p270
      %p272 = scmp.ne.s32.totalorder %s261, %s262
      %p273 = scmp.eq.s32.totalorder %s24, 0
      %p274 = por %p272, %p273
      %p275 = scmp.ne.s32.totalorder %s261, %s262
      %p276 = scmp.eq.s32.totalorder %s25, 3
      %p277 = por %p275, %p276
      %p279 = scmp.ne.s32.totalorder %s262, %s278
      %p280 = scmp.eq.s32.totalorder %s25, 0
      %p281 = por %p279, %p280
      %p282 = scmp.le.s32.totalorder 1, %s19
      %p283 = scmp.lt.s32.totalorder %s19, 5
      %p284 = pnand %p282, %p283
      %p285 = pneg %p284
      // Predicated region
      $region9: #{tpu_custom_call.1} parent=5 // pred_check
        _
      $region10: #{tpu_custom_call.1} parent=5 // pred_check_branch
        %287 = sbr.rel (%p284) target = $region12
      $region11: #{tpu_custom_call.1} parent=5 // pred_region
        %s288 = ssub.s32 %s19, 1
        // Predicated region
        $region13: #{tpu_custom_call.1} parent=11 // pred_check
          %p289 = pneg %p80
        $region14: #{tpu_custom_call.1} parent=11 // pred_check_branch
          %291 = sbr.rel (%p289) target = $region16
        $region15: #{tpu_custom_call.1} parent=11 // pred_region
          _
        $region16: #{tpu_custom_call.1} parent=11 // pred_fallthru
          _
        // Predicated region
        $region17: #{tpu_custom_call.1} parent=11 // pred_check
          %p292 = pneg %p101
        $region18: #{tpu_custom_call.1} parent=11 // pred_check_branch
          %294 = sbr.rel (%p292) target = $region20
        $region19: #{tpu_custom_call.1} parent=11 // pred_region
          _
        $region20: #{tpu_custom_call.1} parent=11 // pred_fallthru
          _
        // Predicated region
        $region21: #{tpu_custom_call.1} parent=11 // pred_check
          %p295 = pneg %p122
        $region22: #{tpu_custom_call.1} parent=11 // pred_check_branch
          %297 = sbr.rel (%p295) target = $region24
        $region23: #{tpu_custom_call.1} parent=11 // pred_region
          _
        $region24: #{tpu_custom_call.1} parent=11 // pred_fallthru
          _
        // Predicated region
        $region25: #{tpu_custom_call.1} parent=11 // pred_check
          %p298 = pneg %p143
        $region26: #{tpu_custom_call.1} parent=11 // pred_check_branch
          %300 = sbr.rel (%p298) target = $region28
        $region27: #{tpu_custom_call.1} parent=11 // pred_region
          _
        $region28: #{tpu_custom_call.1} parent=11 // pred_fallthru
          _
        // Predicated region
        $region29: #{tpu_custom_call.1} parent=11 // pred_check
          %p301 = pneg %p164
        $region30: #{tpu_custom_call.1} parent=11 // pred_check_branch
          %303 = sbr.rel (%p301) target = $region32
        $region31: #{tpu_custom_call.1} parent=11 // pred_region
          _
        $region32: #{tpu_custom_call.1} parent=11 // pred_fallthru
          _
        // Predicated region
        $region33: #{tpu_custom_call.1} parent=11 // pred_check
          %p304 = pneg %p185
        $region34: #{tpu_custom_call.1} parent=11 // pred_check_branch
          %306 = sbr.rel (%p304) target = $region36
        $region35: #{tpu_custom_call.1} parent=11 // pred_region
          _
        $region36: #{tpu_custom_call.1} parent=11 // pred_fallthru
          _
        // Predicated region
        $region37: #{tpu_custom_call.1} parent=11 // pred_check
          %p307 = pneg %p206
        $region38: #{tpu_custom_call.1} parent=11 // pred_check_branch
          %309 = sbr.rel (%p307) target = $region40
        $region39: #{tpu_custom_call.1} parent=11 // pred_region
          _
        $region40: #{tpu_custom_call.1} parent=11 // pred_fallthru
          _
        // Predicated region
        $region41: #{tpu_custom_call.1} parent=11 // pred_check
          %p310 = pneg %p227
        $region42: #{tpu_custom_call.1} parent=11 // pred_check_branch
          %312 = sbr.rel (%p310) target = $region44
        $region43: #{tpu_custom_call.1} parent=11 // pred_region
          _
        $region44: #{tpu_custom_call.1} parent=11 // pred_fallthru
          _
        // Predicated region
        $region45: #{tpu_custom_call.1} parent=11 // pred_check
          %p313 = pneg %p248
        $region46: #{tpu_custom_call.1} parent=11 // pred_check_branch
          %315 = sbr.rel (%p313) target = $region48
        $region47: #{tpu_custom_call.1} parent=11 // pred_region
          _
        $region48: #{tpu_custom_call.1} parent=11 // pred_fallthru
          _
      $region12: #{tpu_custom_call.1} parent=5 // pred_fallthru
        _
      %p316 = scmp.lt.s32.totalorder %s19, 4
      // Predicated region
      $region49: #{tpu_custom_call.1} parent=5 // pred_check
        %p317 = pneg %p316
      $region50: #{tpu_custom_call.1} parent=5 // pred_check_branch
        %319 = sbr.rel (%p317) target = $region52
      $region51: #{tpu_custom_call.1} parent=5 // pred_region
        // Predicated region
        $region53: #{tpu_custom_call.1} parent=51 // pred_check
          %p320 = pneg %p53
        $region54: #{tpu_custom_call.1} parent=51 // pred_check_branch
          %322 = sbr.rel (%p320) target = $region56
        $region55: #{tpu_custom_call.1} parent=51 // pred_region
          %s323 = smul.u32 4, %s27
          %p324 = scmp.lt.s32.totalorder %s26, 1
          %s325 = scalar_select %p324, %s26, 1
          %p326 = scmp.lt.s32.totalorder %s323, 7
          %s327 = scalar_select %p326, %s323, 7
          %s328 = smul.addr %s325, 8
          %s329 = sadd.s32 %s327, %s328
          %s330 = smul.addr %s329, 4
          %s331 = scalar_lea.vmem %s0, %s330
          %s332 = smul.u32 4, %s27
        $region56: #{tpu_custom_call.1} parent=51 // pred_fallthru
          _
      $region52: #{tpu_custom_call.1} parent=5 // pred_fallthru
        _
      %p333 = scmp.le.s32.totalorder 1, %s19
      %p334 = scmp.lt.s32.totalorder %s19, 5
      %p335 = pnand %p333, %p334
      %p336 = pneg %p335
      // Predicated region
      $region57: #{tpu_custom_call.1} parent=5 // pred_check
        _
      $region58: #{tpu_custom_call.1} parent=5 // pred_check_branch
        %338 = sbr.rel (%p335) target = $region60
      $region59: #{tpu_custom_call.1} parent=5 // pred_region
        %s339 = ssub.s32 %s19, 1
        %s340 = smul.u32 4, %s29
        %p341 = scmp.lt.s32.totalorder %s28, 1
        %s342 = scalar_select %p341, %s28, 1
        %p343 = scmp.lt.s32.totalorder %s340, 7
        %s344 = scalar_select %p343, %s340, 7
        %s345 = smul.addr %s342, 8
        %s346 = sadd.s32 %s344, %s345
        %s347 = smul.addr %s346, 4
        %s348 = scalar_lea.vmem %s0, %s347
        %p349 = pneg %p59
        %p350 = pneg %p56
        %p351 = pneg %p80
        %p352 = pneg %p77
        %p353 = pneg %p101
        %p354 = pneg %p98
        %p355 = pneg %p122
        %p356 = pneg %p119
        %p357 = pneg %p143
        %p358 = pneg %p140
        %p359 = pneg %p164
        %p360 = pneg %p161
        %p361 = pneg %p185
        %p362 = pneg %p182
        %p363 = pneg %p206
        %p364 = pneg %p203
        %p365 = pneg %p227
        %p366 = pneg %p224
        %p367 = pneg %p248
        %p368 = pneg %p245
        %p369 = pneg %p274
        %p370 = pneg %p271
        %s371 = sand.u32 %s261, 1
        %s372 = scalar_lea.sflag [#allocation6], %s371
        %s373 = sand.u32 %s261, 1
        %s374 = smul.addr %s373, 8
        %s375 = scalar_lea.vmem [#allocation5], %s374
        %s376 = smul.u32 4, %s29
        %p377 = scmp.lt.s32.totalorder %s28, 1
        %s378 = scalar_select %p377, %s28, 1
        %p379 = scmp.lt.s32.totalorder %s376, 7
        %s380 = scalar_select %p379, %s376, 7
        %s381 = smul.addr %s378, 8
        %s382 = sadd.s32 %s380, %s381
        %s383 = smul.addr %s382, 4
        %s384 = scalar_lea.vmem %s0, %s383
        %s385 = smul.u32 4, %s29
        %v387 = vld [vmem:[%s384] sm:$0xf]
        %v388 = vld [vmem:[%s384 + $0x4] sm:$0xf]
        %v389 = vld [vmem:[%s384 + $0x8] sm:$0xf]
        %v390 = vld [vmem:[%s384 + $0xc] sm:$0xf]
        %v391 = vld [vmem:[%s1] sm:$0xf]
        %v392 = vld [vmem:[%s1 + $0x4] sm:$0xf]
        %v393 = vld [vmem:[%s2] sm:$0x1]
        %v395 = vlaneseq
        %v396 = vshrl.u32 %v395, 7
        %v397 = vsub.s32 0, %v396
        %v398 = vrot.slane %v393, %v397
        %v404 = vunpack.c.l.b16 %v387
        %v405 = vunpack.c.l.b16 %v388
        %v406 = vunpack.c.l.b16 %v389
        %v407 = vunpack.c.l.b16 %v390
        %v408 = vpack.c.b16 %v405, %v404
        %v409 = vpack.c.b16 %v407, %v406
        %v412 = vunpack.c.l.b16 %v391
        %v413 = vunpack.c.l.b16 %v392
        %v414 = vpack.c.b16 %v413, %v412
        %vm416 = vcmask 130048
        %v418 = vsel %vm416, %v408, 0
        %v421 = vsel %vm416, %v409, 0
        %423 = vmatprep.subr.bf16.mxu0 0
        %424 = vmatpush1.bf16.msra.mxu0 %v414
        %425 = vmatprep.subr.bf16.mxu0 0
        %426 = vmatpush1.bf16.msra.mxu0 0
        %427 = vmatprep.subr.bf16.mxu0 0
        %428 = vmatpush1.bf16.msra.mxu0 0
        %429 = vmatprep.subr.bf16.mxu0 0
        %430 = vmatpush1.bf16.msra.mxu0 0
        %431 = vmatprep.subr.bf16.mxu0 0
        %432 = vmatpush1.bf16.msra.mxu0 0
        %433 = vmatprep.subr.bf16.mxu0 0
        %434 = vmatpush1.bf16.msra.mxu0 0
        %435 = vmatprep.subr.bf16.mxu0 0
        %436 = vmatpush1.bf16.msra.mxu0 0
        %437 = vmatprep.subr.bf16.mxu0 0
        %438 = vmatpush1.bf16.msra.mxu0 0
        %439 = vmatprep.subr.bf16.mxu0 0
        %440 = vmatpush1.bf16.msra.mxu0 0
        %441 = vmatprep.subr.bf16.mxu0 0
        %442 = vmatpush1.bf16.msra.mxu0 0
        %443 = vmatprep.subr.bf16.mxu0 0
        %444 = vmatpush1.bf16.msra.mxu0 0
        %445 = vmatprep.subr.bf16.mxu0 0
        %446 = vmatpush1.bf16.msra.mxu0 0
        %447 = vmatprep.subr.bf16.mxu0 0
        %448 = vmatpush1.bf16.msra.mxu0 0
        %449 = vmatprep.subr.bf16.mxu0 0
        %450 = vmatpush1.bf16.msra.mxu0 0
        %451 = vmatprep.subr.bf16.mxu0 0
        %452 = vmatpush1.bf16.msra.mxu0 0
        %453 = vmatprep.subr.bf16.mxu0 0
        %454 = vmatpush1.bf16.msra.mxu0 0
        %455 = vmatprep.mubr.bf16.mxu0 0
        %456 = vmatmul.mubr.bf16.gmra.mrb[0].mxu0 %v418
        %v457 = vpop.f32.mrb[0].mxu0
        %v458 = vadd.f32 %v398, %v457
        %v459 = vpop.f32.mrb[0].mxu0
        %v460 = vpop.f32.mrb[0].mxu0
        %v461 = vadd.f32 %v398, %v460
        %v462 = vpop.f32.mrb[0].mxu0
        %463 = vmatprep.mubr.bf16.mxu0 0
        %464 = vmatmul.mubr.bf16.gmra.mrb[0].mxu0 %v421
        %v465 = vpop.f32.mrb[0].mxu0
        %v466 = vadd.f32 %v398, %v465
        %v467 = vpop.f32.mrb[0].mxu0
        %v468 = vpop.f32.mrb[0].mxu0
        %v469 = vadd.f32 %v398, %v468
        %v470 = vpop.f32.mrb[0].mxu0
        %471 = vdwg.mxu0
        %vm472 = vcmask 261120
        %v473 = vsel %vm472, %v458, 0.0
        %474 = vadd.xlane.f32.xlu0 %v473
        %v475 = vpop.xlane.xlu0 %474
        %v476 = vsel %vm472, %v461, 0.0
        %477 = vadd.xlane.f32.xlu0 %v476
        %v478 = vpop.xlane.xlu0 %477
        %v479 = vsel %vm472, %v466, 0.0
        %480 = vadd.xlane.f32.xlu0 %v479
        %v481 = vpop.xlane.xlu0 %480
        %v482 = vsel %vm472, %v469, 0.0
        %483 = vadd.xlane.f32.xlu0 %v482
        %v484 = vpop.xlane.xlu0 %483
        %v485 = vrcp.pop 32.0
        %v486 = vmul.f32 %v475, %v485
        %v487 = vmul.f32 %v478, %v485
        %v488 = vmul.f32 %v481, %v485
        %v489 = vmul.f32 %v484, %v485
        %v490 = vsub.f32 %v458, %v486
        %v491 = vsub.f32 %v461, %v487
        %v492 = vsub.f32 %v466, %v488
        %v493 = vsub.f32 %v469, %v489
        %v494 = vmul.f32 %v490, %v490
        %v495 = vmul.f32 %v491, %v491
        %v496 = vmul.f32 %v492, %v492
        %v497 = vmul.f32 %v493, %v493
        %v498 = vsel %vm472, %v494, 0.0
        %499 = vadd.xlane.f32.xlu0 %v498
        %v500 = vpop.xlane.xlu0 %499
        %v501 = vsel %vm472, %v495, 0.0
        %502 = vadd.xlane.f32.xlu0 %v501
        %v503 = vpop.xlane.xlu0 %502
        %v504 = vsel %vm472, %v496, 0.0
        %505 = vadd.xlane.f32.xlu0 %v504
        %v506 = vpop.xlane.xlu0 %505
        %v507 = vsel %vm472, %v497, 0.0
        %508 = vadd.xlane.f32.xlu0 %v507
        %v509 = vpop.xlane.xlu0 %508
        %v510 = vmul.f32 %v500, %v485
        %v511 = vmul.f32 %v503, %v485
        %v512 = vmul.f32 %v506, %v485
        %v513 = vmul.f32 %v509, %v485
        %v514 = vadd.f32 %v510, 1e-05
        %v515 = vadd.f32 %v511, 1e-05
        %v516 = vadd.f32 %v512, 1e-05
        %v517 = vadd.f32 %v513, 1e-05
        %v518 = vrsqrt.pop %v514
        %v519 = vrsqrt.pop %v515
        %v520 = vrsqrt.pop %v516
        %v521 = vrsqrt.pop %v517
        %v522 = vmul.f32 %v490, %v518
        %v523 = vmul.f32 %v491, %v519
        %v524 = vmul.f32 %v492, %v520
        %v525 = vmul.f32 %v493, %v521
        %v526 = vld [vmem:[%s3] sm:$0x1]
        %v528 = vlaneseq
        %v529 = vshrl.u32 %v528, 7
        %v530 = vsub.s32 0, %v529
        %v531 = vrot.slane %v526, %v530
        %v533 = vmul.f32 %v522, %v531
        %v534 = vmul.f32 %v523, %v531
        %v535 = vmul.f32 %v524, %v531
        %v536 = vmul.f32 %v525, %v531
        %v537 = vld [vmem:[%s4] sm:$0x1]
        %v539 = vlaneseq
        %v540 = vshrl.u32 %v539, 7
        %v541 = vsub.s32 0, %v540
        %v542 = vrot.slane %v537, %v541
        %v544 = vadd.f32 %v533, %v542
        %v545 = vadd.f32 %v534, %v542
        %v546 = vadd.f32 %v535, %v542
        %v547 = vadd.f32 %v536, %v542
        %v548 = vtanh.pop %v544
        %v549 = vtanh.pop %v545
        %v550 = vtanh.pop %v546
        %v551 = vtanh.pop %v547
        %v552 = vpack.c.bf16 %v549, %v548
        %v553 = vpack.c.bf16 %v551, %v550
        %v554 = vld [vmem:[%s5] sm:$0xf]
        %v555 = vld [vmem:[%s5 + $0x4] sm:$0xf]
        %v556 = vld [vmem:[%s5 + $0x8] sm:$0xf]
        %v557 = vld [vmem:[%s5 + $0xc] sm:$0xf]
        %v558 = vld [vmem:[%s7] sm:$0x1]
        %v560 = vlaneseq
        %v561 = vshrl.u32 %v560, 7
        %v562 = vsub.s32 0, %v561
        %v563 = vrot.slane %v558, %v562
        %v569 = vunpack.c.l.b16 %v554
        %v570 = vunpack.c.l.b16 %v555
        %v571 = vunpack.c.l.b16 %v556
        %v572 = vunpack.c.l.b16 %v557
        %v573 = vpack.c.b16 %v570, %v569
        %v574 = vpack.c.b16 %v572, %v571
        %v578 = vsel %vm472, %v552, 0
        %v581 = vsel %vm472, %v553, 0
        %583 = vmatprep.subr.bf16.mxu0 0
        %584 = vmatpush1.bf16.msra.mxu0 %v573
        %585 = vmatprep.subr.bf16.mxu0 0
        %586 = vmatpush1.bf16.msra.mxu0 %v574
        %587 = vmatprep.subr.bf16.mxu0 0
        %588 = vmatpush1.bf16.msra.mxu0 0
        %589 = vmatprep.subr.bf16.mxu0 0
        %590 = vmatpush1.bf16.msra.mxu0 0
        %591 = vmatprep.subr.bf16.mxu0 0
        %592 = vmatpush1.bf16.msra.mxu0 0
        %593 = vmatprep.subr.bf16.mxu0 0
        %594 = vmatpush1.bf16.msra.mxu0 0
        %595 = vmatprep.subr.bf16.mxu0 0
        %596 = vmatpush1.bf16.msra.mxu0 0
        %597 = vmatprep.subr.bf16.mxu0 0
        %598 = vmatpush1.bf16.msra.mxu0 0
        %599 = vmatprep.subr.bf16.mxu0 0
        %600 = vmatpush1.bf16.msra.mxu0 0
        %601 = vmatprep.subr.bf16.mxu0 0
        %602 = vmatpush1.bf16.msra.mxu0 0
        %603 = vmatprep.subr.bf16.mxu0 0
        %604 = vmatpush1.bf16.msra.mxu0 0
        %605 = vmatprep.subr.bf16.mxu0 0
        %606 = vmatpush1.bf16.msra.mxu0 0
        %607 = vmatprep.subr.bf16.mxu0 0
        %608 = vmatpush1.bf16.msra.mxu0 0
        %609 = vmatprep.subr.bf16.mxu0 0
        %610 = vmatpush1.bf16.msra.mxu0 0
        %611 = vmatprep.subr.bf16.mxu0 0
        %612 = vmatpush1.bf16.msra.mxu0 0
        %613 = vmatprep.subr.bf16.mxu0 0
        %614 = vmatpush1.bf16.msra.mxu0 0
        %615 = vmatprep.mubr.bf16.mxu0 0
        %616 = vmatmul.mubr.bf16.gmra.mrb[0].mxu0 %v578
        %v617 = vpop.f32.mrb[0].mxu0
        %v618 = vadd.f32 %v563, %v617
        %v619 = vpop.f32.mrb[0].mxu0
        %v620 = vpop.f32.mrb[0].mxu0
        %v621 = vadd.f32 %v563, %v620
        %v622 = vpop.f32.mrb[0].mxu0
        %623 = vmatprep.mubr.bf16.mxu0 0
        %624 = vmatmul.mubr.bf16.gmra.mrb[0].mxu0 %v581
        %v625 = vpop.f32.mrb[0].mxu0
        %v626 = vadd.f32 %v563, %v625
        %v627 = vpop.f32.mrb[0].mxu0
        %v628 = vpop.f32.mrb[0].mxu0
        %v629 = vadd.f32 %v563, %v628
        %v630 = vpop.f32.mrb[0].mxu0
        %631 = vdwg.mxu0
        %632 = vst [vmem:[#allocation2] sm:$0xff] %v618
        %633 = vst [vmem:[#allocation2 + $0x8] sm:$0xff] %v621
        %634 = vst [vmem:[#allocation2 + $0x10] sm:$0xff] %v626
        %635 = vst [vmem:[#allocation2 + $0x18] sm:$0xff] %v629
        %p636 = scmp.eq.s32.totalorder %s29, 0
        // Predicated region
        $region61: #{tpu_custom_call.1} parent=59 // pred_check
          %p637 = pneg %p636
        $region62: #{tpu_custom_call.1} parent=59 // pred_check_branch
          %639 = sbr.rel (%p637) target = $region64
        $region63: #{tpu_custom_call.1} parent=59 // pred_region
          %640 = vst.msk [vmem:[#allocation3] sm:$0xff] %vm472, 0.0
          %641 = vst.msk [vmem:[#allocation4] sm:$0xff] %vm472, 0.0
        $region64: #{tpu_custom_call.1} parent=59 // pred_fallthru
          _
        %v642 = vld [vmem:[%s6] sm:$0xf]
        %v643 = vld [vmem:[%s6 + $0x4] sm:$0xf]
        %v644 = vld [vmem:[%s6 + $0x8] sm:$0xf]
        %v645 = vld [vmem:[%s6 + $0xc] sm:$0xf]
        %v646 = vld [vmem:[#allocation3] sm:$0xff]
        %v647 = vld [vmem:[#allocation4] sm:$0xff]
        %v648 = vld [vmem:[#allocation2] sm:$0xff]
        %v649 = vpack.c.bf16 %v646, %v646
        %v654 = vunpack.c.l.b16 %v642
        %v655 = vunpack.c.l.b16 %v643
        %v656 = vunpack.c.l.b16 %v644
        %v657 = vunpack.c.l.b16 %v645
        %v658 = vpack.c.b16 %v655, %v654
        %v659 = vpack.c.b16 %v657, %v656
        %v663 = vsel %vm472, %v649, 0
        %665 = vmatprep.subr.bf16.mxu0 0
        %666 = vmatpush1.bf16.msra.mxu0 %v658
        %667 = vmatprep.subr.bf16.mxu0 0
        %668 = vmatpush1.bf16.msra.mxu0 %v659
        %669 = vmatprep.subr.bf16.mxu0 0
        %670 = vmatpush1.bf16.msra.mxu0 0
        %671 = vmatprep.subr.bf16.mxu0 0
        %672 = vmatpush1.bf16.msra.mxu0 0
        %673 = vmatprep.subr.bf16.mxu0 0
        %674 = vmatpush1.bf16.msra.mxu0 0
        %675 = vmatprep.subr.bf16.mxu0 0
        %676 = vmatpush1.bf16.msra.mxu0 0
        %677 = vmatprep.subr.bf16.mxu0 0
        %678 = vmatpush1.bf16.msra.mxu0 0
        %679 = vmatprep.subr.bf16.mxu0 0
        %680 = vmatpush1.bf16.msra.mxu0 0
        %681 = vmatprep.subr.bf16.mxu0 0
        %682 = vmatpush1.bf16.msra.mxu0 0
        %683 = vmatprep.subr.bf16.mxu0 0
        %684 = vmatpush1.bf16.msra.mxu0 0
        %685 = vmatprep.subr.bf16.mxu0 0
        %686 = vmatpush1.bf16.msra.mxu0 0
        %687 = vmatprep.subr.bf16.mxu0 0
        %688 = vmatpush1.bf16.msra.mxu0 0
        %689 = vmatprep.subr.bf16.mxu0 0
        %690 = vmatpush1.bf16.msra.mxu0 0
        %691 = vmatprep.subr.bf16.mxu0 0
        %692 = vmatpush1.bf16.msra.mxu0 0
        %693 = vmatprep.subr.bf16.mxu0 0
        %694 = vmatpush1.bf16.msra.mxu0 0
        %695 = vmatprep.subr.bf16.mxu0 0
        %696 = vmatpush1.bf16.msra.mxu0 0
        %697 = vmatprep.mubr.bf16.mxu0 0
        %698 = vmatmul.mubr.bf16.gmra.mrb[0].mxu0 %v663
        %v699 = vpop.f32.mrb[0].mxu0
        %v700 = vadd.f32 0.0, %v699
        %v701 = vpop.f32.mrb[0].mxu0
        %v702 = vpop.f32.mrb[0].mxu0
        %v703 = vpop.f32.mrb[0].mxu0
        %704 = vdwg.mxu0
        %v705 = vadd.f32 %v648, %v700
        %v706 = vxor.u32 %v705, 2147483648
        %v707 = vmul.f32 %v706, 1.442695
        %v708 = vpow.pop %v707
        %v709 = vadd.f32 %v708, 1.0
        %v710 = vrcp.pop %v709
        %v711 = vmul.f32 1.0, %v710
        %v712 = vtanh.pop %v705
        %714 = vrot.lane.b32.xlu0 %v647, 32
        %v715 = vpop.permute.xlu0 %714
        %v717 = vmul.f32 %v711, %v715
        %719 = vrot.lane.b32.xlu0 %v712, 32
        %v720 = vpop.permute.xlu0 %719
        %v722 = vmul.f32 %v711, %v720
        %724 = vrot.lane.b32.xlu0 %v722, 32
        %v725 = vpop.permute.xlu0 %724
        %v727 = vadd.f32 %v717, %v725
        %v728 = vtanh.pop %v727
        %730 = vrot.lane.b32.xlu0 %v728, 32
        %v731 = vpop.permute.xlu0 %730
        %v733 = vmul.f32 %v711, %v731
        %s734 = scalar_lea.vmem [#allocation2], 8
        %v735 = vld [vmem:[%s734] sm:$0xff]
        %v736 = vpack.c.bf16 %v733, %v733
        %738 = vrot.lane.b32.xlu0 %v736, 64
        %v739 = vpop.permute.xlu0 %738
        %v741 = vsel %vm472, %v739, 0
        %743 = vmatprep.subr.bf16.mxu0 0
        %744 = vmatpush1.bf16.msra.mxu0 %v658
        %745 = vmatprep.subr.bf16.mxu0 0
        %746 = vmatpush1.bf16.msra.mxu0 %v659
        %747 = vmatprep.subr.bf16.mxu0 0
        %748 = vmatpush1.bf16.msra.mxu0 0
        %749 = vmatprep.subr.bf16.mxu0 0
        %750 = vmatpush1.bf16.msra.mxu0 0
        %751 = vmatprep.subr.bf16.mxu0 0
        %752 = vmatpush1.bf16.msra.mxu0 0
        %753 = vmatprep.subr.bf16.mxu0 0
        %754 = vmatpush1.bf16.msra.mxu0 0
        %755 = vmatprep.subr.bf16.mxu0 0
        %756 = vmatpush1.bf16.msra.mxu0 0
        %757 = vmatprep.subr.bf16.mxu0 0
        %758 = vmatpush1.bf16.msra.mxu0 0
        %759 = vmatprep.subr.bf16.mxu0 0
        %760 = vmatpush1.bf16.msra.mxu0 0
        %761 = vmatprep.subr.bf16.mxu0 0
        %762 = vmatpush1.bf16.msra.mxu0 0
        %763 = vmatprep.subr.bf16.mxu0 0
        %764 = vmatpush1.bf16.msra.mxu0 0
        %765 = vmatprep.subr.bf16.mxu0 0
        %766 = vmatpush1.bf16.msra.mxu0 0
        %767 = vmatprep.subr.bf16.mxu0 0
        %768 = vmatpush1.bf16.msra.mxu0 0
        %769 = vmatprep.subr.bf16.mxu0 0
        %770 = vmatpush1.bf16.msra.mxu0 0
        %771 = vmatprep.subr.bf16.mxu0 0
        %772 = vmatpush1.bf16.msra.mxu0 0
        %773 = vmatprep.subr.bf16.mxu0 0
        %774 = vmatpush1.bf16.msra.mxu0 0
        %775 = vmatprep.mubr.bf16.mxu0 0
        %776 = vmatmul.mubr.bf16.gmra.mrb[0].mxu0 %v741
        %v777 = vpop.f32.mrb[0].mxu0
        %v778 = vadd.f32 0.0, %v777
        %v779 = vpop.f32.mrb[0].mxu0
        %v780 = vpop.f32.mrb[0].mxu0
        %v781 = vpop.f32.mrb[0].mxu0
        %782 = vdwg.mxu0
        %v783 = vadd.f32 %v735, %v778
        %v784 = vxor.u32 %v783, 2147483648
        %v785 = vmul.f32 %v784, 1.442695
        %v786 = vpow.pop %v785
        %v787 = vadd.f32 %v786, 1.0
        %v788 = vrcp.pop %v787
        %v789 = vmul.f32 1.0, %v788
        %v790 = vtanh.pop %v783
        %v791 = vmul.f32 %v789, %v727
        %793 = vrot.lane.b32.xlu0 %v790, 32
        %v794 = vpop.permute.xlu0 %793
        %v796 = vmul.f32 %v789, %v794
        %798 = vrot.lane.b32.xlu0 %v796, 32
        %v799 = vpop.permute.xlu0 %798
        %v801 = vadd.f32 %v791, %v799
        %v802 = vtanh.pop %v801
        %804 = vrot.lane.b32.xlu0 %v802, 32
        %v805 = vpop.permute.xlu0 %804
        %v807 = vmul.f32 %v789, %v805
        %s808 = scalar_lea.vmem [#allocation2], 16
        %v809 = vld [vmem:[%s808] sm:$0xff]
        %v810 = vpack.c.bf16 %v807, %v807
        %812 = vrot.lane.b32.xlu0 %v810, 64
        %v813 = vpop.permute.xlu0 %812
        %v815 = vsel %vm472, %v813, 0
        %817 = vmatprep.subr.bf16.mxu0 0
        %818 = vmatpush1.bf16.msra.mxu0 %v658
        %819 = vmatprep.subr.bf16.mxu0 0
        %820 = vmatpush1.bf16.msra.mxu0 %v659
        %821 = vmatprep.subr.bf16.mxu0 0
        %822 = vmatpush1.bf16.msra.mxu0 0
        %823 = vmatprep.subr.bf16.mxu0 0
        %824 = vmatpush1.bf16.msra.mxu0 0
        %825 = vmatprep.subr.bf16.mxu0 0
        %826 = vmatpush1.bf16.msra.mxu0 0
        %827 = vmatprep.subr.bf16.mxu0 0
        %828 = vmatpush1.bf16.msra.mxu0 0
        %829 = vmatprep.subr.bf16.mxu0 0
        %830 = vmatpush1.bf16.msra.mxu0 0
        %831 = vmatprep.subr.bf16.mxu0 0
        %832 = vmatpush1.bf16.msra.mxu0 0
        %833 = vmatprep.subr.bf16.mxu0 0
        %834 = vmatpush1.bf16.msra.mxu0 0
        %835 = vmatprep.subr.bf16.mxu0 0
        %836 = vmatpush1.bf16.msra.mxu0 0
        %837 = vmatprep.subr.bf16.mxu0 0
        %838 = vmatpush1.bf16.msra.mxu0 0
        %839 = vmatprep.subr.bf16.mxu0 0
        %840 = vmatpush1.bf16.msra.mxu0 0
        %841 = vmatprep.subr.bf16.mxu0 0
        %842 = vmatpush1.bf16.msra.mxu0 0
        %843 = vmatprep.subr.bf16.mxu0 0
        %844 = vmatpush1.bf16.msra.mxu0 0
        %845 = vmatprep.subr.bf16.mxu0 0
        %846 = vmatpush1.bf16.msra.mxu0 0
        %847 = vmatprep.subr.bf16.mxu0 0
        %848 = vmatpush1.bf16.msra.mxu0 0
        %849 = vmatprep.mubr.bf16.mxu0 0
        %850 = vmatmul.mubr.bf16.gmra.mrb[0].mxu0 %v815
        %v851 = vpop.f32.mrb[0].mxu0
        %v852 = vadd.f32 0.0, %v851
        %v853 = vpop.f32.mrb[0].mxu0
        %v854 = vpop.f32.mrb[0].mxu0
        %v855 = vpop.f32.mrb[0].mxu0
        %856 = vdwg.mxu0
        %v857 = vadd.f32 %v809, %v852
        %v858 = vxor.u32 %v857, 2147483648
        %v859 = vmul.f32 %v858, 1.442695
        %v860 = vpow.pop %v859
        %v861 = vadd.f32 %v860, 1.0
        %v862 = vrcp.pop %v861
        %v863 = vmul.f32 1.0, %v862
        %v864 = vtanh.pop %v857
        %v865 = vmul.f32 %v863, %v801
        %867 = vrot.lane.b32.xlu0 %v864, 32
        %v868 = vpop.permute.xlu0 %867
        %v870 = vmul.f32 %v863, %v868
        %872 = vrot.lane.b32.xlu0 %v870, 32
        %v873 = vpop.permute.xlu0 %872
        %v875 = vadd.f32 %v865, %v873
        %v876 = vtanh.pop %v875
        %878 = vrot.lane.b32.xlu0 %v876, 32
        %v879 = vpop.permute.xlu0 %878
        %v881 = vmul.f32 %v863, %v879
        %s882 = scalar_lea.vmem [#allocation2], 24
        %v883 = vld [vmem:[%s882] sm:$0xff]
        %v884 = vpack.c.bf16 %v881, %v881
        %886 = vrot.lane.b32.xlu0 %v884, 64
        %v887 = vpop.permute.xlu0 %886
        %v889 = vsel %vm472, %v887, 0
        %891 = vmatprep.subr.bf16.mxu0 0
        %892 = vmatpush1.bf16.msra.mxu0 %v658
        %893 = vmatprep.subr.bf16.mxu0 0
        %894 = vmatpush1.bf16.msra.mxu0 %v659
        %895 = vmatprep.subr.bf16.mxu0 0
        %896 = vmatpush1.bf16.msra.mxu0 0
        %897 = vmatprep.subr.bf16.mxu0 0
        %898 = vmatpush1.bf16.msra.mxu0 0
        %899 = vmatprep.subr.bf16.mxu0 0
        %900 = vmatpush1.bf16.msra.mxu0 0
        %901 = vmatprep.subr.bf16.mxu0 0
        %902 = vmatpush1.bf16.msra.mxu0 0
        %903 = vmatprep.subr.bf16.mxu0 0
        %904 = vmatpush1.bf16.msra.mxu0 0
        %905 = vmatprep.subr.bf16.mxu0 0
        %906 = vmatpush1.bf16.msra.mxu0 0
        %907 = vmatprep.subr.bf16.mxu0 0
        %908 = vmatpush1.bf16.msra.mxu0 0
        %909 = vmatprep.subr.bf16.mxu0 0
        %910 = vmatpush1.bf16.msra.mxu0 0
        %911 = vmatprep.subr.bf16.mxu0 0
        %912 = vmatpush1.bf16.msra.mxu0 0
        %913 = vmatprep.subr.bf16.mxu0 0
        %914 = vmatpush1.bf16.msra.mxu0 0
        %915 = vmatprep.subr.bf16.mxu0 0
        %916 = vmatpush1.bf16.msra.mxu0 0
        %917 = vmatprep.subr.bf16.mxu0 0
        %918 = vmatpush1.bf16.msra.mxu0 0
        %919 = vmatprep.subr.bf16.mxu0 0
        %920 = vmatpush1.bf16.msra.mxu0 0
        %921 = vmatprep.subr.bf16.mxu0 0
        %922 = vmatpush1.bf16.msra.mxu0 0
        %923 = vmatprep.mubr.bf16.mxu0 0
        %924 = vmatmul.mubr.bf16.gmra.mrb[0].mxu0 %v889
        %v925 = vpop.f32.mrb[0].mxu0
        %v926 = vadd.f32 0.0, %v925
        %v927 = vpop.f32.mrb[0].mxu0
        %v928 = vpop.f32.mrb[0].mxu0
        %v929 = vpop.f32.mrb[0].mxu0
        %930 = vdwg.mxu0
        %v931 = vadd.f32 %v883, %v926
        %v932 = vxor.u32 %v931, 2147483648
        %v933 = vmul.f32 %v932, 1.442695
        %v934 = vpow.pop %v933
        %v935 = vadd.f32 %v934, 1.0
        %v936 = vrcp.pop %v935
        %v937 = vmul.f32 1.0, %v936
        %v938 = vtanh.pop %v931
        %v939 = vmul.f32 %v937, %v875
        %941 = vrot.lane.b32.xlu0 %v938, 32
        %v942 = vpop.permute.xlu0 %941
        %v944 = vmul.f32 %v937, %v942
        %946 = vrot.lane.b32.xlu0 %v944, 32
        %v947 = vpop.permute.xlu0 %946
        %v949 = vadd.f32 %v939, %v947
        %v950 = vtanh.pop %v949
        %952 = vrot.lane.b32.xlu0 %v950, 32
        %v953 = vpop.permute.xlu0 %952
        %v955 = vmul.f32 %v937, %v953
        %957 = vrot.lane.b32.xlu0 %v955, 64
        %v958 = vpop.permute.xlu0 %957
        %960 = vst.msk [vmem:[#allocation3] sm:$0xff] %vm472, %v958
        %962 = vrot.lane.b32.xlu0 %v949, 96
        %v963 = vpop.permute.xlu0 %962
        %965 = vst.msk [vmem:[#allocation4] sm:$0xff] %vm472, %v963
        %p966 = scmp.eq.s32.totalorder %s29, 1
        // Predicated region
        $region65: #{tpu_custom_call.1} parent=59 // pred_check
          %p967 = pneg %p966
        $region66: #{tpu_custom_call.1} parent=59 // pred_check_branch
          %969 = sbr.rel (%p967) target = $region68
        $region67: #{tpu_custom_call.1} parent=59 // pred_region
          %v970 = vpack.c.bf16 %v551, %v551
          %v971 = vld [vmem:[%s8] sm:$0xf]
          %v972 = vld [vmem:[%s8 + $0x4] sm:$0xf]
          %v973 = vld [vmem:[%s8 + $0x8] sm:$0xf]
          %v974 = vld [vmem:[%s8 + $0xc] sm:$0xf]
          %v975 = vld [vmem:[%s9] sm:$0x1]
          %v977 = vlaneseq
          %v978 = vshrl.u32 %v977, 7
          %v979 = vsub.s32 0, %v978
          %v980 = vrot.slane %v975, %v979
          %v986 = vunpack.c.l.b16 %v971
          %v987 = vunpack.c.l.b16 %v972
          %v988 = vunpack.c.l.b16 %v973
          %v989 = vunpack.c.l.b16 %v974
          %v990 = vpack.c.b16 %v987, %v986
          %v991 = vpack.c.b16 %v989, %v988
          %v995 = vsel %vm472, %v970, 0
          %997 = vmatprep.subr.bf16.mxu0 0
          %998 = vmatpush1.bf16.msra.mxu0 %v990
          %999 = vmatprep.subr.bf16.mxu0 0
          %1000 = vmatpush1.bf16.msra.mxu0 %v991
          %1001 = vmatprep.subr.bf16.mxu0 0
          %1002 = vmatpush1.bf16.msra.mxu0 0
          %1003 = vmatprep.subr.bf16.mxu0 0
          %1004 = vmatpush1.bf16.msra.mxu0 0
          %1005 = vmatprep.subr.bf16.mxu0 0
          %1006 = vmatpush1.bf16.msra.mxu0 0
          %1007 = vmatprep.subr.bf16.mxu0 0
          %1008 = vmatpush1.bf16.msra.mxu0 0
          %1009 = vmatprep.subr.bf16.mxu0 0
          %1010 = vmatpush1.bf16.msra.mxu0 0
          %1011 = vmatprep.subr.bf16.mxu0 0
          %1012 = vmatpush1.bf16.msra.mxu0 0
          %1013 = vmatprep.subr.bf16.mxu0 0
          %1014 = vmatpush1.bf16.msra.mxu0 0
          %1015 = vmatprep.subr.bf16.mxu0 0
          %1016 = vmatpush1.bf16.msra.mxu0 0
          %1017 = vmatprep.subr.bf16.mxu0 0
          %1018 = vmatpush1.bf16.msra.mxu0 0
          %1019 = vmatprep.subr.bf16.mxu0 0
          %1020 = vmatpush1.bf16.msra.mxu0 0
          %1021 = vmatprep.subr.bf16.mxu0 0
          %1022 = vmatpush1.bf16.msra.mxu0 0
          %1023 = vmatprep.subr.bf16.mxu0 0
          %1024 = vmatpush1.bf16.msra.mxu0 0
          %1025 = vmatprep.subr.bf16.mxu0 0
          %1026 = vmatpush1.bf16.msra.mxu0 0
          %1027 = vmatprep.subr.bf16.mxu0 0
          %1028 = vmatpush1.bf16.msra.mxu0 0
          %1029 = vmatprep.mubr.bf16.mxu0 0
          %1030 = vmatmul.mubr.bf16.gmra.mrb[0].mxu0 %v995
          %v1031 = vpop.f32.mrb[0].mxu0
          %v1032 = vadd.f32 %v980, %v1031
          %v1033 = vpop.f32.mrb[0].mxu0
          %v1034 = vpop.f32.mrb[0].mxu0
          %v1035 = vpop.f32.mrb[0].mxu0
          %1036 = vdwg.mxu0
          %v1037 = vxor.u32 %v1032, 2147483648
          %v1038 = vmul.f32 %v1037, 1.442695
          %v1039 = vpow.pop %v1038
          %v1040 = vadd.f32 %v1039, 1.0
          %v1041 = vrcp.pop %v1040
          %v1042 = vmul.f32 1.0, %v1041
          %v1043 = vtanh.pop %v1032
          %v1044 = vmul.f32 %v1042, 0.0
          %1046 = vrot.lane.b32.xlu0 %v1043, 32
          %v1047 = vpop.permute.xlu0 %1046
          %v1049 = vmul.f32 %v1042, %v1047
          %1051 = vrot.lane.b32.xlu0 %v1049, 32
          %v1052 = vpop.permute.xlu0 %1051
          %v1054 = vadd.f32 %v1044, %v1052
          %v1055 = vtanh.pop %v1054
          %1057 = vrot.lane.b32.xlu0 %v1055, 32
          %v1058 = vpop.permute.xlu0 %1057
          %v1060 = vmul.f32 %v1042, %v1058
          %v1061 = vadd.f32 %v955, %v1060
          %v1062 = vmul.f32 %v1061, 0.5
          %1064 = vrot.lane.b32.xlu0 %v1062, 64
          %v1065 = vpop.permute.xlu0 %1064
          %1067 = vst.msk [vmem:[%s375] sm:$0xff] %vm472, %v1065
        $region68: #{tpu_custom_call.1} parent=59 // pred_fallthru
          _
        %s1068 = sand.u32 %s261, 1
        %s1069 = scalar_lea.sflag [#allocation6], %s1068
        %s1070 = sand.u32 %s261, 1
        %s1071 = smul.addr %s1070, 8
        %s1072 = scalar_lea.vmem [#allocation5], %s1071
        // Predicated region
        $region69: #{tpu_custom_call.1} parent=59 // pred_check
          %p1073 = pneg %p271
        $region70: #{tpu_custom_call.1} parent=59 // pred_check_branch
          %1075 = sbr.rel (%p1073) target = $region72
        $region71: #{tpu_custom_call.1} parent=59 // pred_region
          %s1077 = ssub.s32 128, 128
          %1078 = vsyncadd %s1069, %s1077
          %s1079 = smul.addr %s28, 128
          %s1080 = scalar_lea.hbm %s10, %s1079
          %s1082 = sshll.u32 %s1072, 4
          %s1083 = int_to_ptr.vmem [resolvable:$true] %s1082
          %1085 = dma.vmem_to_hbm [thread:$0]  %s1083, 128, %s1080, %s1069
        $region72: #{tpu_custom_call.1} parent=59 // pred_fallthru
          _
      $region60: #{tpu_custom_call.1} parent=5 // pred_fallthru
        _
      %p1086 = scmp.le.s32.totalorder 2, %s19
      // Predicated region
      $region73: #{tpu_custom_call.1} parent=5 // pred_check
        %p1087 = pneg %p1086
      $region74: #{tpu_custom_call.1} parent=5 // pred_check_branch
        %1089 = sbr.rel (%p1087) target = $region76
      $region75: #{tpu_custom_call.1} parent=5 // pred_region
        %s1090 = ssub.s32 %s19, 2
        // Predicated region
        $region77: #{tpu_custom_call.1} parent=75 // pred_check
          %p1091 = pneg %p277
        $region78: #{tpu_custom_call.1} parent=75 // pred_check_branch
          %1093 = sbr.rel (%p1091) target = $region80
        $region79: #{tpu_custom_call.1} parent=75 // pred_region
          %s1094 = sand.u32 %s262, 1
          %s1095 = scalar_lea.sflag [#allocation6], %s1094
          %s1096 = sand.u32 %s262, 1
          %s1097 = smul.addr %s1096, 8
          %s1098 = scalar_lea.vmem [#allocation5], %s1097
          %1099 = dma.done %s1095, 128
        $region80: #{tpu_custom_call.1} parent=75 // pred_fallthru
          _
      $region76: #{tpu_custom_call.1} parent=5 // pred_fallthru
        _
    $region6: #{tpu_custom_call.1} parent=1 // loop_footer
      %s23 = sadd.s32 1, %s19
    $region7: #{tpu_custom_call.1} parent=1 // loop_footer_branch
      %18 = sbr.rel target = $region3
    $region8: #{tpu_custom_call.1} parent=1 // loop_exit
      _
    %1100 = vsyncpa [#allocation6], 1
    %s1101 = scalar_lea.sflag [#allocation6], 1
    %1102 = vsyncpa %s1101, 1

</llo_original>
